<compile_context>
chip_gen: v7x
topology: tpu7x:2x2x1
jax: 0.10.0
libtpu: 0.0.40
codegen_flags: <defaults>
</compile_context>

<pallas_src>
import jax
import jax.numpy as jnp
from jax import lax
from jax.experimental import pallas as pl
from jax.experimental.pallas import tpu as pltpu

LSTM_HIDDEN = 4
OUT_HIDDEN = 64
NUM_CLASSES = 1024


def _net_kernel(x_ref, wih_ref, whh_t_ref, b_ref, whid_t_ref, wout_t_ref, o_ref):
    """Single-program kernel: LSTM over time + relu(Linear) + Linear.

    Shapes (all VMEM-resident, full blocks); gate column order is [i, f, o, g]:
      x_ref      : (seq, batch)        f32   (already transposed on the host)
      wih_ref    : (1, 4*H)            f32   (W_ih, permuted, flattened)
      whh_t_ref  : (H, 4*H)            f32   (W_hh permuted, transposed)
      b_ref      : (1, 4*H)            f32   (b_ih + b_hh, permuted)
      whid_t_ref : (H, OUT_HIDDEN)     f32   (l_hidden_last.weight.T)
      wout_t_ref : (OUT_HIDDEN, CLS)   f32   (l_out.weight.T)
      o_ref      : (batch, CLS)        f32
    """
    seq, batch = x_ref.shape
    H = LSTM_HIDDEN

    wih = wih_ref[...]        # (1, 4H)
    whh_t = whh_t_ref[...]    # (H, 4H)
    b = b_ref[...]            # (1, 4H)

    # --- Hoisted out of the recurrence: input contribution + bias for every
    # time step in one full-vreg VPU pass: (seq, batch, 4H), ~8 KB. ---
    x_all = x_ref[...]                                             # (seq, batch)
    xw_b = x_all[:, :, None] * wih[None, :, :] + b[None, :, :]     # (seq, batch, 4H)

    # Rows of W_hh^T, hoisted (each a (1, 4H) broadcastable row).
    whh_rows = [whh_t[k:k + 1, :] for k in range(H)]

    h = jnp.zeros((batch, H), jnp.float32)
    c = jnp.zeros((batch, H), jnp.float32)

    # --- Fully unrolled serial recurrence (seq is a small static constant).
    # The (batch,H)@(H,4H) recurrent update is H broadcast mul-adds on the VPU;
    # no MXU round-trip sits on the loop-carried critical path. ---
    for t in range(seq):
        gates = xw_b[t]                                  # (batch, 4H)
        for k in range(H):                               # unrolled at trace time
            gates = gates + h[:, k:k + 1] * whh_rows[k]
        sig = jax.nn.sigmoid(gates[:, : 3 * H])          # [i | f | o] in one slab
        g_g = jnp.tanh(gates[:, 3 * H:])                 # candidate gate
        i_g = sig[:, 0 * H:1 * H]
        f_g = sig[:, 1 * H:2 * H]
        o_g = sig[:, 2 * H:3 * H]
        c = f_g * c + i_g * g_g
        h = o_g * jnp.tanh(c)

    # features_final = relu(l_hidden_last(h))   (no bias)
    feat = jnp.maximum(
        jnp.dot(h, whid_t_ref[...], preferred_element_type=jnp.float32), 0.0)
    # Dropout(0.7) in eval mode is the identity (inference semantics).
    # out = l_out(features_final)               (no bias) -> lane-dense (batch, 1024)
    o_ref[...] = jnp.dot(feat, wout_t_ref[...], preferred_element_type=jnp.float32)


def prepare_params(params):
    """One-time parameter prep (call once, NOT per forward step).

    Reorders the LSTM gate blocks from PyTorch's [i, f, g, o] to [i, f, o, g],
    folds the two biases, and pre-transposes every weight so the kernel only
    does right-multiplies / broadcasts.
    """
    H = LSTM_HIDDEN
    perm = jnp.concatenate([
        jnp.arange(0, 2 * H),        # i, f
        jnp.arange(3 * H, 4 * H),    # o
        jnp.arange(2 * H, 3 * H),    # g
    ])
    w_ih = params["w_ih"][perm, :]                        # (4H, 1)
    w_hh = params["w_hh"][perm, :]                        # (4H, H)
    bias = (params["b_ih"] + params["b_hh"])[perm]        # (4H,)
    return {
        "wih_flat": w_ih.T,                               # (1, 4H)
        "whh_t": w_hh.T,                                  # (H, 4H)
        "b": bias.reshape(1, 4 * H),                      # (1, 4H)
        "whid_t": params["w_hidden"].T,                   # (H, 64)
        "wout_t": params["w_out"].T,                      # (64, 1024)
    }


@jax.jit
def net_forward(x, prepped):
    """x: (batch, seq) f32, prepped = prepare_params(params).
    Returns {'out': (batch, NUM_CLASSES) f32}."""
    batch, _ = x.shape
    x_sb = x.T  # (seq, batch): matches the module's x.T; per-step reads are rows.
    out = pl.pallas_call(
        _net_kernel,
        out_shape=jax.ShapeDtypeStruct((batch, NUM_CLASSES), jnp.float32),
        in_specs=[pl.BlockSpec(memory_space=pltpu.MemorySpace.VMEM)] * 6,
        out_specs=pl.BlockSpec(memory_space=pltpu.MemorySpace.VMEM),
    )(x_sb, prepped["wih_flat"], prepped["whh_t"], prepped["b"],
      prepped["whid_t"], prepped["wout_t"])
    return {"out": out}


def init_params(key):
    """Deterministic synthetic parameters matching the PyTorch module's shapes."""
    ks = jax.random.split(key, 6)
    scale = 0.1
    return {
        # nn.LSTM(input_size=1, hidden_size=4): gate order [i, f, g, o]
        "w_ih": scale * jax.random.normal(ks[0], (4 * LSTM_HIDDEN, 1), jnp.float32),
        "w_hh": scale * jax.random.normal(ks[1], (4 * LSTM_HIDDEN, LSTM_HIDDEN), jnp.float32),
        "b_ih": scale * jax.random.normal(ks[2], (4 * LSTM_HIDDEN,), jnp.float32),
        "b_hh": scale * jax.random.normal(ks[3], (4 * LSTM_HIDDEN,), jnp.float32),
        # Linear(4 -> 64, bias=False): weight shape (out, in)
        "w_hidden": scale * jax.random.normal(ks[4], (OUT_HIDDEN, LSTM_HIDDEN), jnp.float32),
        # Linear(64 -> 1024, bias=False)
        "w_out": scale * jax.random.normal(ks[5], (NUM_CLASSES, OUT_HIDDEN), jnp.float32),
    }


def _reference_forward(x, params):
    """Pure-JAX reference mirroring PyTorch semantics (eval mode), for checking."""
    H = LSTM_HIDDEN
    batch, _ = x.shape
    w_ih, w_hh = params["w_ih"], params["w_hh"]
    b = params["b_ih"] + params["b_hh"]

    def step(carry, x_t):
        h, c = carry
        gates = x_t[:, None] @ w_ih.T + h @ w_hh.T + b
        i = jax.nn.sigmoid(gates[:, 0 * H:1 * H])
        f = jax.nn.sigmoid(gates[:, 1 * H:2 * H])
        g = jnp.tanh(gates[:, 2 * H:3 * H])
        o = jax.nn.sigmoid(gates[:, 3 * H:4 * H])
        c = f * c + i * g
        h = o * jnp.tanh(c)
        return (h, c), None

    h0 = jnp.zeros((batch, H), jnp.float32)
    (h, _), _ = lax.scan(step, (h0, h0), x.T)
    feat = jnp.maximum(h @ params["w_hidden"].T, 0.0)
    return feat @ params["w_out"].T


# NOTE: bn_2 (BatchNorm2d) and max_pool (MaxPool2d) in __init__ are never used in
# forward(), so they are intentionally not implemented.
# TODO(synk): Dropout(0.7) is implemented as identity (eval-mode semantics); no
# stochastic training-mode dropout is emitted.


if __name__ == "__main__":
    key = jax.random.PRNGKey(0)
    pkey, xkey = jax.random.split(key)

    params = init_params(pkey)
    prepped = prepare_params(params)   # one-time weight prep (hoisted out of forward)

    batch, seq = 8, 16
    x = jax.random.normal(xkey, (batch, seq), jnp.float32)

    out = net_forward(x, prepped)
    jax.block_until_ready(out["out"])

    assert out["out"].shape == (batch, NUM_CLASSES)
    assert out["out"].dtype == jnp.float32

    ref = _reference_forward(x, params)
    assert jnp.allclose(out["out"], ref, rtol=1e-3, atol=1e-4), (
        "max abs err = %e" % float(jnp.max(jnp.abs(out["out"] - ref))))

    print("KERNEL_OK")
</pallas_src>

<mosaic_0001>
module attributes {stable_mosaic.version = 11 : i64} {
  func.func @_net_kernel(%arg0: memref<16x8xf32, #tpu.memory_space<vmem>>, %arg1: memref<1x16xf32, #tpu.memory_space<vmem>>, %arg2: memref<4x16xf32, #tpu.memory_space<vmem>>, %arg3: memref<1x16xf32, #tpu.memory_space<vmem>>, %arg4: memref<4x64xf32, #tpu.memory_space<vmem>>, %arg5: memref<64x1024xf32, #tpu.memory_space<vmem>>, %arg6: memref<8x1024xf32, #tpu.memory_space<vmem>>) attributes {dimension_semantics = [], scalar_prefetch = 0 : i64, scratch_operands = 0 : i64, tpu.core_type = #tpu.core_type<tc>} {
    %c0 = arith.constant 0 : index
    %c0_0 = arith.constant 0 : index
    %0 = vector.load %arg1[%c0, %c0_0] : memref<1x16xf32, #tpu.memory_space<vmem>>, vector<1x16xf32>
    %c0_1 = arith.constant 0 : index
    %c0_2 = arith.constant 0 : index
    %1 = vector.load %arg2[%c0_1, %c0_2] : memref<4x16xf32, #tpu.memory_space<vmem>>, vector<4x16xf32>
    %c0_3 = arith.constant 0 : index
    %c0_4 = arith.constant 0 : index
    %2 = vector.load %arg3[%c0_3, %c0_4] : memref<1x16xf32, #tpu.memory_space<vmem>>, vector<1x16xf32>
    %c0_5 = arith.constant 0 : index
    %c0_6 = arith.constant 0 : index
    %3 = vector.load %arg0[%c0_5, %c0_6] : memref<16x8xf32, #tpu.memory_space<vmem>>, vector<16x8xf32>
    %4 = vector.shape_cast %3 : vector<16x8xf32> to vector<16x8x1xf32>
    %5 = vector.shape_cast %0 : vector<1x16xf32> to vector<1x1x16xf32>
    %6 = vector.broadcast %4 : vector<16x8x1xf32> to vector<16x8x16xf32>
    %7 = vector.broadcast %5 : vector<1x1x16xf32> to vector<16x8x16xf32>
    %8 = arith.mulf %6, %7 : vector<16x8x16xf32>
    %9 = vector.shape_cast %2 : vector<1x16xf32> to vector<1x1x16xf32>
    %10 = vector.broadcast %9 : vector<1x1x16xf32> to vector<16x8x16xf32>
    %11 = arith.addf %8, %10 : vector<16x8x16xf32>
    %12 = vector.extract_strided_slice %1 {offsets = [0, 0], sizes = [1, 16], strides = [1, 1]} : vector<4x16xf32> to vector<1x16xf32>
    %13 = vector.extract_strided_slice %1 {offsets = [1, 0], sizes = [1, 16], strides = [1, 1]} : vector<4x16xf32> to vector<1x16xf32>
    %14 = vector.extract_strided_slice %1 {offsets = [2, 0], sizes = [1, 16], strides = [1, 1]} : vector<4x16xf32> to vector<1x16xf32>
    %15 = vector.extract_strided_slice %1 {offsets = [3, 0], sizes = [1, 16], strides = [1, 1]} : vector<4x16xf32> to vector<1x16xf32>
    %cst = arith.constant 0.000000e+00 : f32
    %16 = vector.broadcast %cst : f32 to vector<8x4xf32>
    %cst_7 = arith.constant 0.000000e+00 : f32
    %17 = vector.broadcast %cst_7 : f32 to vector<8x4xf32>
    %18 = vector.extract_strided_slice %11 {offsets = [0, 0, 0], sizes = [1, 8, 16], strides = [1, 1, 1]} : vector<16x8x16xf32> to vector<1x8x16xf32>
    %19 = vector.shape_cast %18 : vector<1x8x16xf32> to vector<8x16xf32>
    %20 = vector.extract_strided_slice %16 {offsets = [0, 0], sizes = [8, 1], strides = [1, 1]} : vector<8x4xf32> to vector<8x1xf32>
    %21 = vector.broadcast %20 : vector<8x1xf32> to vector<8x16xf32>
    %22 = vector.broadcast %12 : vector<1x16xf32> to vector<8x16xf32>
    %23 = arith.mulf %21, %22 : vector<8x16xf32>
    %24 = arith.addf %19, %23 : vector<8x16xf32>
    %25 = vector.extract_strided_slice %16 {offsets = [0, 1], sizes = [8, 1], strides = [1, 1]} : vector<8x4xf32> to vector<8x1xf32>
    %26 = vector.broadcast %25 : vector<8x1xf32> to vector<8x16xf32>
    %27 = vector.broadcast %13 : vector<1x16xf32> to vector<8x16xf32>
    %28 = arith.mulf %26, %27 : vector<8x16xf32>
    %29 = arith.addf %24, %28 : vector<8x16xf32>
    %30 = vector.extract_strided_slice %16 {offsets = [0, 2], sizes = [8, 1], strides = [1, 1]} : vector<8x4xf32> to vector<8x1xf32>
    %31 = vector.broadcast %30 : vector<8x1xf32> to vector<8x16xf32>
    %32 = vector.broadcast %14 : vector<1x16xf32> to vector<8x16xf32>
    %33 = arith.mulf %31, %32 : vector<8x16xf32>
    %34 = arith.addf %29, %33 : vector<8x16xf32>
    %35 = vector.extract_strided_slice %16 {offsets = [0, 3], sizes = [8, 1], strides = [1, 1]} : vector<8x4xf32> to vector<8x1xf32>
    %36 = vector.broadcast %35 : vector<8x1xf32> to vector<8x16xf32>
    %37 = vector.broadcast %15 : vector<1x16xf32> to vector<8x16xf32>
    %38 = arith.mulf %36, %37 : vector<8x16xf32>
    %39 = arith.addf %34, %38 : vector<8x16xf32>
    %40 = vector.extract_strided_slice %39 {offsets = [0, 0], sizes = [8, 12], strides = [1, 1]} : vector<8x16xf32> to vector<8x12xf32>
    %41 = arith.negf %40 : vector<8x12xf32>
    %42 = math.exp %41 : vector<8x12xf32>
    %cst_8 = arith.constant 1.000000e+00 : f32
    %43 = vector.broadcast %cst_8 : f32 to vector<8x12xf32>
    %44 = arith.addf %43, %42 : vector<8x12xf32>
    %45 = arith.divf %43, %44 : vector<8x12xf32>
    %46 = vector.extract_strided_slice %39 {offsets = [0, 12], sizes = [8, 4], strides = [1, 1]} : vector<8x16xf32> to vector<8x4xf32>
    %47 = math.tanh %46 : vector<8x4xf32>
    %48 = vector.extract_strided_slice %45 {offsets = [0, 0], sizes = [8, 4], strides = [1, 1]} : vector<8x12xf32> to vector<8x4xf32>
    %49 = vector.extract_strided_slice %45 {offsets = [0, 4], sizes = [8, 4], strides = [1, 1]} : vector<8x12xf32> to vector<8x4xf32>
    %50 = vector.extract_strided_slice %45 {offsets = [0, 8], sizes = [8, 4], strides = [1, 1]} : vector<8x12xf32> to vector<8x4xf32>
    %51 = arith.mulf %49, %17 : vector<8x4xf32>
    %52 = arith.mulf %48, %47 : vector<8x4xf32>
    %53 = arith.addf %51, %52 : vector<8x4xf32>
    %54 = math.tanh %53 : vector<8x4xf32>
    %55 = arith.mulf %50, %54 : vector<8x4xf32>
    %56 = vector.extract_strided_slice %11 {offsets = [1, 0, 0], sizes = [1, 8, 16], strides = [1, 1, 1]} : vector<16x8x16xf32> to vector<1x8x16xf32>
    %57 = vector.shape_cast %56 : vector<1x8x16xf32> to vector<8x16xf32>
    %58 = vector.extract_strided_slice %55 {offsets = [0, 0], sizes = [8, 1], strides = [1, 1]} : vector<8x4xf32> to vector<8x1xf32>
    %59 = vector.broadcast %58 : vector<8x1xf32> to vector<8x16xf32>
    %60 = vector.broadcast %12 : vector<1x16xf32> to vector<8x16xf32>
    %61 = arith.mulf %59, %60 : vector<8x16xf32>
    %62 = arith.addf %57, %61 : vector<8x16xf32>
    %63 = vector.extract_strided_slice %55 {offsets = [0, 1], sizes = [8, 1], strides = [1, 1]} : vector<8x4xf32> to vector<8x1xf32>
    %64 = vector.broadcast %63 : vector<8x1xf32> to vector<8x16xf32>
    %65 = vector.broadcast %13 : vector<1x16xf32> to vector<8x16xf32>
    %66 = arith.mulf %64, %65 : vector<8x16xf32>
    %67 = arith.addf %62, %66 : vector<8x16xf32>
    %68 = vector.extract_strided_slice %55 {offsets = [0, 2], sizes = [8, 1], strides = [1, 1]} : vector<8x4xf32> to vector<8x1xf32>
    %69 = vector.broadcast %68 : vector<8x1xf32> to vector<8x16xf32>
    %70 = vector.broadcast %14 : vector<1x16xf32> to vector<8x16xf32>
    %71 = arith.mulf %69, %70 : vector<8x16xf32>
    %72 = arith.addf %67, %71 : vector<8x16xf32>
    %73 = vector.extract_strided_slice %55 {offsets = [0, 3], sizes = [8, 1], strides = [1, 1]} : vector<8x4xf32> to vector<8x1xf32>
    %74 = vector.broadcast %73 : vector<8x1xf32> to vector<8x16xf32>
    %75 = vector.broadcast %15 : vector<1x16xf32> to vector<8x16xf32>
    %76 = arith.mulf %74, %75 : vector<8x16xf32>
    %77 = arith.addf %72, %76 : vector<8x16xf32>
    %78 = vector.extract_strided_slice %77 {offsets = [0, 0], sizes = [8, 12], strides = [1, 1]} : vector<8x16xf32> to vector<8x12xf32>
    %79 = arith.negf %78 : vector<8x12xf32>
    %80 = math.exp %79 : vector<8x12xf32>
    %cst_9 = arith.constant 1.000000e+00 : f32
    %81 = vector.broadcast %cst_9 : f32 to vector<8x12xf32>
    %82 = arith.addf %81, %80 : vector<8x12xf32>
    %83 = arith.divf %81, %82 : vector<8x12xf32>
    %84 = vector.extract_strided_slice %77 {offsets = [0, 12], sizes = [8, 4], strides = [1, 1]} : vector<8x16xf32> to vector<8x4xf32>
    %85 = math.tanh %84 : vector<8x4xf32>
    %86 = vector.extract_strided_slice %83 {offsets = [0, 0], sizes = [8, 4], strides = [1, 1]} : vector<8x12xf32> to vector<8x4xf32>
    %87 = vector.extract_strided_slice %83 {offsets = [0, 4], sizes = [8, 4], strides = [1, 1]} : vector<8x12xf32> to vector<8x4xf32>
    %88 = vector.extract_strided_slice %83 {offsets = [0, 8], sizes = [8, 4], strides = [1, 1]} : vector<8x12xf32> to vector<8x4xf32>
    %89 = arith.mulf %87, %53 : vector<8x4xf32>
    %90 = arith.mulf %86, %85 : vector<8x4xf32>
    %91 = arith.addf %89, %90 : vector<8x4xf32>
    %92 = math.tanh %91 : vector<8x4xf32>
    %93 = arith.mulf %88, %92 : vector<8x4xf32>
    %94 = vector.extract_strided_slice %11 {offsets = [2, 0, 0], sizes = [1, 8, 16], strides = [1, 1, 1]} : vector<16x8x16xf32> to vector<1x8x16xf32>
    %95 = vector.shape_cast %94 : vector<1x8x16xf32> to vector<8x16xf32>
    %96 = vector.extract_strided_slice %93 {offsets = [0, 0], sizes = [8, 1], strides = [1, 1]} : vector<8x4xf32> to vector<8x1xf32>
    %97 = vector.broadcast %96 : vector<8x1xf32> to vector<8x16xf32>
    %98 = vector.broadcast %12 : vector<1x16xf32> to vector<8x16xf32>
    %99 = arith.mulf %97, %98 : vector<8x16xf32>
    %100 = arith.addf %95, %99 : vector<8x16xf32>
    %101 = vector.extract_strided_slice %93 {offsets = [0, 1], sizes = [8, 1], strides = [1, 1]} : vector<8x4xf32> to vector<8x1xf32>
    %102 = vector.broadcast %101 : vector<8x1xf32> to vector<8x16xf32>
    %103 = vector.broadcast %13 : vector<1x16xf32> to vector<8x16xf32>
    %104 = arith.mulf %102, %103 : vector<8x16xf32>
    %105 = arith.addf %100, %104 : vector<8x16xf32>
    %106 = vector.extract_strided_slice %93 {offsets = [0, 2], sizes = [8, 1], strides = [1, 1]} : vector<8x4xf32> to vector<8x1xf32>
    %107 = vector.broadcast %106 : vector<8x1xf32> to vector<8x16xf32>
    %108 = vector.broadcast %14 : vector<1x16xf32> to vector<8x16xf32>
    %109 = arith.mulf %107, %108 : vector<8x16xf32>
    %110 = arith.addf %105, %109 : vector<8x16xf32>
    %111 = vector.extract_strided_slice %93 {offsets = [0, 3], sizes = [8, 1], strides = [1, 1]} : vector<8x4xf32> to vector<8x1xf32>
    %112 = vector.broadcast %111 : vector<8x1xf32> to vector<8x16xf32>
    %113 = vector.broadcast %15 : vector<1x16xf32> to vector<8x16xf32>
    %114 = arith.mulf %112, %113 : vector<8x16xf32>
    %115 = arith.addf %110, %114 : vector<8x16xf32>
    %116 = vector.extract_strided_slice %115 {offsets = [0, 0], sizes = [8, 12], strides = [1, 1]} : vector<8x16xf32> to vector<8x12xf32>
    %117 = arith.negf %116 : vector<8x12xf32>
    %118 = math.exp %117 : vector<8x12xf32>
    %cst_10 = arith.constant 1.000000e+00 : f32
    %119 = vector.broadcast %cst_10 : f32 to vector<8x12xf32>
    %120 = arith.addf %119, %118 : vector<8x12xf32>
    %121 = arith.divf %119, %120 : vector<8x12xf32>
    %122 = vector.extract_strided_slice %115 {offsets = [0, 12], sizes = [8, 4], strides = [1, 1]} : vector<8x16xf32> to vector<8x4xf32>
    %123 = math.tanh %122 : vector<8x4xf32>
    %124 = vector.extract_strided_slice %121 {offsets = [0, 0], sizes = [8, 4], strides = [1, 1]} : vector<8x12xf32> to vector<8x4xf32>
    %125 = vector.extract_strided_slice %121 {offsets = [0, 4], sizes = [8, 4], strides = [1, 1]} : vector<8x12xf32> to vector<8x4xf32>
    %126 = vector.extract_strided_slice %121 {offsets = [0, 8], sizes = [8, 4], strides = [1, 1]} : vector<8x12xf32> to vector<8x4xf32>
    %127 = arith.mulf %125, %91 : vector<8x4xf32>
    %128 = arith.mulf %124, %123 : vector<8x4xf32>
    %129 = arith.addf %127, %128 : vector<8x4xf32>
    %130 = math.tanh %129 : vector<8x4xf32>
    %131 = arith.mulf %126, %130 : vector<8x4xf32>
    %132 = vector.extract_strided_slice %11 {offsets = [3, 0, 0], sizes = [1, 8, 16], strides = [1, 1, 1]} : vector<16x8x16xf32> to vector<1x8x16xf32>
    %133 = vector.shape_cast %132 : vector<1x8x16xf32> to vector<8x16xf32>
    %134 = vector.extract_strided_slice %131 {offsets = [0, 0], sizes = [8, 1], strides = [1, 1]} : vector<8x4xf32> to vector<8x1xf32>
    %135 = vector.broadcast %134 : vector<8x1xf32> to vector<8x16xf32>
    %136 = vector.broadcast %12 : vector<1x16xf32> to vector<8x16xf32>
    %137 = arith.mulf %135, %136 : vector<8x16xf32>
    %138 = arith.addf %133, %137 : vector<8x16xf32>
    %139 = vector.extract_strided_slice %131 {offsets = [0, 1], sizes = [8, 1], strides = [1, 1]} : vector<8x4xf32> to vector<8x1xf32>
    %140 = vector.broadcast %139 : vector<8x1xf32> to vector<8x16xf32>
    %141 = vector.broadcast %13 : vector<1x16xf32> to vector<8x16xf32>
    %142 = arith.mulf %140, %141 : vector<8x16xf32>
    %143 = arith.addf %138, %142 : vector<8x16xf32>
    %144 = vector.extract_strided_slice %131 {offsets = [0, 2], sizes = [8, 1], strides = [1, 1]} : vector<8x4xf32> to vector<8x1xf32>
    %145 = vector.broadcast %144 : vector<8x1xf32> to vector<8x16xf32>
    %146 = vector.broadcast %14 : vector<1x16xf32> to vector<8x16xf32>
    %147 = arith.mulf %145, %146 : vector<8x16xf32>
    %148 = arith.addf %143, %147 : vector<8x16xf32>
    %149 = vector.extract_strided_slice %131 {offsets = [0, 3], sizes = [8, 1], strides = [1, 1]} : vector<8x4xf32> to vector<8x1xf32>
    %150 = vector.broadcast %149 : vector<8x1xf32> to vector<8x16xf32>
    %151 = vector.broadcast %15 : vector<1x16xf32> to vector<8x16xf32>
    %152 = arith.mulf %150, %151 : vector<8x16xf32>
    %153 = arith.addf %148, %152 : vector<8x16xf32>
    %154 = vector.extract_strided_slice %153 {offsets = [0, 0], sizes = [8, 12], strides = [1, 1]} : vector<8x16xf32> to vector<8x12xf32>
    %155 = arith.negf %154 : vector<8x12xf32>
    %156 = math.exp %155 : vector<8x12xf32>
    %cst_11 = arith.constant 1.000000e+00 : f32
    %157 = vector.broadcast %cst_11 : f32 to vector<8x12xf32>
    %158 = arith.addf %157, %156 : vector<8x12xf32>
    %159 = arith.divf %157, %158 : vector<8x12xf32>
    %160 = vector.extract_strided_slice %153 {offsets = [0, 12], sizes = [8, 4], strides = [1, 1]} : vector<8x16xf32> to vector<8x4xf32>
    %161 = math.tanh %160 : vector<8x4xf32>
    %162 = vector.extract_strided_slice %159 {offsets = [0, 0], sizes = [8, 4], strides = [1, 1]} : vector<8x12xf32> to vector<8x4xf32>
    %163 = vector.extract_strided_slice %159 {offsets = [0, 4], sizes = [8, 4], strides = [1, 1]} : vector<8x12xf32> to vector<8x4xf32>
    %164 = vector.extract_strided_slice %159 {offsets = [0, 8], sizes = [8, 4], strides = [1, 1]} : vector<8x12xf32> to vector<8x4xf32>
    %165 = arith.mulf %163, %129 : vector<8x4xf32>
    %166 = arith.mulf %162, %161 : vector<8x4xf32>
    %167 = arith.addf %165, %166 : vector<8x4xf32>
    %168 = math.tanh %167 : vector<8x4xf32>
    %169 = arith.mulf %164, %168 : vector<8x4xf32>
    %170 = vector.extract_strided_slice %11 {offsets = [4, 0, 0], sizes = [1, 8, 16], strides = [1, 1, 1]} : vector<16x8x16xf32> to vector<1x8x16xf32>
    %171 = vector.shape_cast %170 : vector<1x8x16xf32> to vector<8x16xf32>
    %172 = vector.extract_strided_slice %169 {offsets = [0, 0], sizes = [8, 1], strides = [1, 1]} : vector<8x4xf32> to vector<8x1xf32>
    %173 = vector.broadcast %172 : vector<8x1xf32> to vector<8x16xf32>
    %174 = vector.broadcast %12 : vector<1x16xf32> to vector<8x16xf32>
    %175 = arith.mulf %173, %174 : vector<8x16xf32>
    %176 = arith.addf %171, %175 : vector<8x16xf32>
    %177 = vector.extract_strided_slice %169 {offsets = [0, 1], sizes = [8, 1], strides = [1, 1]} : vector<8x4xf32> to vector<8x1xf32>
    %178 = vector.broadcast %177 : vector<8x1xf32> to vector<8x16xf32>
    %179 = vector.broadcast %13 : vector<1x16xf32> to vector<8x16xf32>
    %180 = arith.mulf %178, %179 : vector<8x16xf32>
    %181 = arith.addf %176, %180 : vector<8x16xf32>
    %182 = vector.extract_strided_slice %169 {offsets = [0, 2], sizes = [8, 1], strides = [1, 1]} : vector<8x4xf32> to vector<8x1xf32>
    %183 = vector.broadcast %182 : vector<8x1xf32> to vector<8x16xf32>
    %184 = vector.broadcast %14 : vector<1x16xf32> to vector<8x16xf32>
    %185 = arith.mulf %183, %184 : vector<8x16xf32>
    %186 = arith.addf %181, %185 : vector<8x16xf32>
    %187 = vector.extract_strided_slice %169 {offsets = [0, 3], sizes = [8, 1], strides = [1, 1]} : vector<8x4xf32> to vector<8x1xf32>
    %188 = vector.broadcast %187 : vector<8x1xf32> to vector<8x16xf32>
    %189 = vector.broadcast %15 : vector<1x16xf32> to vector<8x16xf32>
    %190 = arith.mulf %188, %189 : vector<8x16xf32>
    %191 = arith.addf %186, %190 : vector<8x16xf32>
    %192 = vector.extract_strided_slice %191 {offsets = [0, 0], sizes = [8, 12], strides = [1, 1]} : vector<8x16xf32> to vector<8x12xf32>
    %193 = arith.negf %192 : vector<8x12xf32>
    %194 = math.exp %193 : vector<8x12xf32>
    %cst_12 = arith.constant 1.000000e+00 : f32
    %195 = vector.broadcast %cst_12 : f32 to vector<8x12xf32>
    %196 = arith.addf %195, %194 : vector<8x12xf32>
    %197 = arith.divf %195, %196 : vector<8x12xf32>
    %198 = vector.extract_strided_slice %191 {offsets = [0, 12], sizes = [8, 4], strides = [1, 1]} : vector<8x16xf32> to vector<8x4xf32>
    %199 = math.tanh %198 : vector<8x4xf32>
    %200 = vector.extract_strided_slice %197 {offsets = [0, 0], sizes = [8, 4], strides = [1, 1]} : vector<8x12xf32> to vector<8x4xf32>
    %201 = vector.extract_strided_slice %197 {offsets = [0, 4], sizes = [8, 4], strides = [1, 1]} : vector<8x12xf32> to vector<8x4xf32>
    %202 = vector.extract_strided_slice %197 {offsets = [0, 8], sizes = [8, 4], strides = [1, 1]} : vector<8x12xf32> to vector<8x4xf32>
    %203 = arith.mulf %201, %167 : vector<8x4xf32>
    %204 = arith.mulf %200, %199 : vector<8x4xf32>
    %205 = arith.addf %203, %204 : vector<8x4xf32>
    %206 = math.tanh %205 : vector<8x4xf32>
    %207 = arith.mulf %202, %206 : vector<8x4xf32>
    %208 = vector.extract_strided_slice %11 {offsets = [5, 0, 0], sizes = [1, 8, 16], strides = [1, 1, 1]} : vector<16x8x16xf32> to vector<1x8x16xf32>
    %209 = vector.shape_cast %208 : vector<1x8x16xf32> to vector<8x16xf32>
    %210 = vector.extract_strided_slice %207 {offsets = [0, 0], sizes = [8, 1], strides = [1, 1]} : vector<8x4xf32> to vector<8x1xf32>
    %211 = vector.broadcast %210 : vector<8x1xf32> to vector<8x16xf32>
    %212 = vector.broadcast %12 : vector<1x16xf32> to vector<8x16xf32>
    %213 = arith.mulf %211, %212 : vector<8x16xf32>
    %214 = arith.addf %209, %213 : vector<8x16xf32>
    %215 = vector.extract_strided_slice %207 {offsets = [0, 1], sizes = [8, 1], strides = [1, 1]} : vector<8x4xf32> to vector<8x1xf32>
    %216 = vector.broadcast %215 : vector<8x1xf32> to vector<8x16xf32>
    %217 = vector.broadcast %13 : vector<1x16xf32> to vector<8x16xf32>
    %218 = arith.mulf %216, %217 : vector<8x16xf32>
    %219 = arith.addf %214, %218 : vector<8x16xf32>
    %220 = vector.extract_strided_slice %207 {offsets = [0, 2], sizes = [8, 1], strides = [1, 1]} : vector<8x4xf32> to vector<8x1xf32>
    %221 = vector.broadcast %220 : vector<8x1xf32> to vector<8x16xf32>
    %222 = vector.broadcast %14 : vector<1x16xf32> to vector<8x16xf32>
    %223 = arith.mulf %221, %222 : vector<8x16xf32>
    %224 = arith.addf %219, %223 : vector<8x16xf32>
    %225 = vector.extract_strided_slice %207 {offsets = [0, 3], sizes = [8, 1], strides = [1, 1]} : vector<8x4xf32> to vector<8x1xf32>
    %226 = vector.broadcast %225 : vector<8x1xf32> to vector<8x16xf32>
    %227 = vector.broadcast %15 : vector<1x16xf32> to vector<8x16xf32>
    %228 = arith.mulf %226, %227 : vector<8x16xf32>
    %229 = arith.addf %224, %228 : vector<8x16xf32>
    %230 = vector.extract_strided_slice %229 {offsets = [0, 0], sizes = [8, 12], strides = [1, 1]} : vector<8x16xf32> to vector<8x12xf32>
    %231 = arith.negf %230 : vector<8x12xf32>
    %232 = math.exp %231 : vector<8x12xf32>
    %cst_13 = arith.constant 1.000000e+00 : f32
    %233 = vector.broadcast %cst_13 : f32 to vector<8x12xf32>
    %234 = arith.addf %233, %232 : vector<8x12xf32>
    %235 = arith.divf %233, %234 : vector<8x12xf32>
    %236 = vector.extract_strided_slice %229 {offsets = [0, 12], sizes = [8, 4], strides = [1, 1]} : vector<8x16xf32> to vector<8x4xf32>
    %237 = math.tanh %236 : vector<8x4xf32>
    %238 = vector.extract_strided_slice %235 {offsets = [0, 0], sizes = [8, 4], strides = [1, 1]} : vector<8x12xf32> to vector<8x4xf32>
    %239 = vector.extract_strided_slice %235 {offsets = [0, 4], sizes = [8, 4], strides = [1, 1]} : vector<8x12xf32> to vector<8x4xf32>
    %240 = vector.extract_strided_slice %235 {offsets = [0, 8], sizes = [8, 4], strides = [1, 1]} : vector<8x12xf32> to vector<8x4xf32>
    %241 = arith.mulf %239, %205 : vector<8x4xf32>
    %242 = arith.mulf %238, %237 : vector<8x4xf32>
    %243 = arith.addf %241, %242 : vector<8x4xf32>
    %244 = math.tanh %243 : vector<8x4xf32>
    %245 = arith.mulf %240, %244 : vector<8x4xf32>
    %246 = vector.extract_strided_slice %11 {offsets = [6, 0, 0], sizes = [1, 8, 16], strides = [1, 1, 1]} : vector<16x8x16xf32> to vector<1x8x16xf32>
    %247 = vector.shape_cast %246 : vector<1x8x16xf32> to vector<8x16xf32>
    %248 = vector.extract_strided_slice %245 {offsets = [0, 0], sizes = [8, 1], strides = [1, 1]} : vector<8x4xf32> to vector<8x1xf32>
    %249 = vector.broadcast %248 : vector<8x1xf32> to vector<8x16xf32>
    %250 = vector.broadcast %12 : vector<1x16xf32> to vector<8x16xf32>
    %251 = arith.mulf %249, %250 : vector<8x16xf32>
    %252 = arith.addf %247, %251 : vector<8x16xf32>
    %253 = vector.extract_strided_slice %245 {offsets = [0, 1], sizes = [8, 1], strides = [1, 1]} : vector<8x4xf32> to vector<8x1xf32>
    %254 = vector.broadcast %253 : vector<8x1xf32> to vector<8x16xf32>
    %255 = vector.broadcast %13 : vector<1x16xf32> to vector<8x16xf32>
    %256 = arith.mulf %254, %255 : vector<8x16xf32>
    %257 = arith.addf %252, %256 : vector<8x16xf32>
    %258 = vector.extract_strided_slice %245 {offsets = [0, 2], sizes = [8, 1], strides = [1, 1]} : vector<8x4xf32> to vector<8x1xf32>
    %259 = vector.broadcast %258 : vector<8x1xf32> to vector<8x16xf32>
    %260 = vector.broadcast %14 : vector<1x16xf32> to vector<8x16xf32>
    %261 = arith.mulf %259, %260 : vector<8x16xf32>
    %262 = arith.addf %257, %261 : vector<8x16xf32>
    %263 = vector.extract_strided_slice %245 {offsets = [0, 3], sizes = [8, 1], strides = [1, 1]} : vector<8x4xf32> to vector<8x1xf32>
    %264 = vector.broadcast %263 : vector<8x1xf32> to vector<8x16xf32>
    %265 = vector.broadcast %15 : vector<1x16xf32> to vector<8x16xf32>
    %266 = arith.mulf %264, %265 : vector<8x16xf32>
    %267 = arith.addf %262, %266 : vector<8x16xf32>
    %268 = vector.extract_strided_slice %267 {offsets = [0, 0], sizes = [8, 12], strides = [1, 1]} : vector<8x16xf32> to vector<8x12xf32>
    %269 = arith.negf %268 : vector<8x12xf32>
    %270 = math.exp %269 : vector<8x12xf32>
    %cst_14 = arith.constant 1.000000e+00 : f32
    %271 = vector.broadcast %cst_14 : f32 to vector<8x12xf32>
    %272 = arith.addf %271, %270 : vector<8x12xf32>
    %273 = arith.divf %271, %272 : vector<8x12xf32>
    %274 = vector.extract_strided_slice %267 {offsets = [0, 12], sizes = [8, 4], strides = [1, 1]} : vector<8x16xf32> to vector<8x4xf32>
    %275 = math.tanh %274 : vector<8x4xf32>
    %276 = vector.extract_strided_slice %273 {offsets = [0, 0], sizes = [8, 4], strides = [1, 1]} : vector<8x12xf32> to vector<8x4xf32>
    %277 = vector.extract_strided_slice %273 {offsets = [0, 4], sizes = [8, 4], strides = [1, 1]} : vector<8x12xf32> to vector<8x4xf32>
    %278 = vector.extract_strided_slice %273 {offsets = [0, 8], sizes = [8, 4], strides = [1, 1]} : vector<8x12xf32> to vector<8x4xf32>
    %279 = arith.mulf %277, %243 : vector<8x4xf32>
    %280 = arith.mulf %276, %275 : vector<8x4xf32>
    %281 = arith.addf %279, %280 : vector<8x4xf32>
    %282 = math.tanh %281 : vector<8x4xf32>
    %283 = arith.mulf %278, %282 : vector<8x4xf32>
    %284 = vector.extract_strided_slice %11 {offsets = [7, 0, 0], sizes = [1, 8, 16], strides = [1, 1, 1]} : vector<16x8x16xf32> to vector<1x8x16xf32>
    %285 = vector.shape_cast %284 : vector<1x8x16xf32> to vector<8x16xf32>
    %286 = vector.extract_strided_slice %283 {offsets = [0, 0], sizes = [8, 1], strides = [1, 1]} : vector<8x4xf32> to vector<8x1xf32>
    %287 = vector.broadcast %286 : vector<8x1xf32> to vector<8x16xf32>
    %288 = vector.broadcast %12 : vector<1x16xf32> to vector<8x16xf32>
    %289 = arith.mulf %287, %288 : vector<8x16xf32>
    %290 = arith.addf %285, %289 : vector<8x16xf32>
    %291 = vector.extract_strided_slice %283 {offsets = [0, 1], sizes = [8, 1], strides = [1, 1]} : vector<8x4xf32> to vector<8x1xf32>
    %292 = vector.broadcast %291 : vector<8x1xf32> to vector<8x16xf32>
    %293 = vector.broadcast %13 : vector<1x16xf32> to vector<8x16xf32>
    %294 = arith.mulf %292, %293 : vector<8x16xf32>
    %295 = arith.addf %290, %294 : vector<8x16xf32>
    %296 = vector.extract_strided_slice %283 {offsets = [0, 2], sizes = [8, 1], strides = [1, 1]} : vector<8x4xf32> to vector<8x1xf32>
    %297 = vector.broadcast %296 : vector<8x1xf32> to vector<8x16xf32>
    %298 = vector.broadcast %14 : vector<1x16xf32> to vector<8x16xf32>
    %299 = arith.mulf %297, %298 : vector<8x16xf32>
    %300 = arith.addf %295, %299 : vector<8x16xf32>
    %301 = vector.extract_strided_slice %283 {offsets = [0, 3], sizes = [8, 1], strides = [1, 1]} : vector<8x4xf32> to vector<8x1xf32>
    %302 = vector.broadcast %301 : vector<8x1xf32> to vector<8x16xf32>
    %303 = vector.broadcast %15 : vector<1x16xf32> to vector<8x16xf32>
    %304 = arith.mulf %302, %303 : vector<8x16xf32>
    %305 = arith.addf %300, %304 : vector<8x16xf32>
    %306 = vector.extract_strided_slice %305 {offsets = [0, 0], sizes = [8, 12], strides = [1, 1]} : vector<8x16xf32> to vector<8x12xf32>
    %307 = arith.negf %306 : vector<8x12xf32>
    %308 = math.exp %307 : vector<8x12xf32>
    %cst_15 = arith.constant 1.000000e+00 : f32
    %309 = vector.broadcast %cst_15 : f32 to vector<8x12xf32>
    %310 = arith.addf %309, %308 : vector<8x12xf32>
    %311 = arith.divf %309, %310 : vector<8x12xf32>
    %312 = vector.extract_strided_slice %305 {offsets = [0, 12], sizes = [8, 4], strides = [1, 1]} : vector<8x16xf32> to vector<8x4xf32>
    %313 = math.tanh %312 : vector<8x4xf32>
    %314 = vector.extract_strided_slice %311 {offsets = [0, 0], sizes = [8, 4], strides = [1, 1]} : vector<8x12xf32> to vector<8x4xf32>
    %315 = vector.extract_strided_slice %311 {offsets = [0, 4], sizes = [8, 4], strides = [1, 1]} : vector<8x12xf32> to vector<8x4xf32>
    %316 = vector.extract_strided_slice %311 {offsets = [0, 8], sizes = [8, 4], strides = [1, 1]} : vector<8x12xf32> to vector<8x4xf32>
    %317 = arith.mulf %315, %281 : vector<8x4xf32>
    %318 = arith.mulf %314, %313 : vector<8x4xf32>
    %319 = arith.addf %317, %318 : vector<8x4xf32>
    %320 = math.tanh %319 : vector<8x4xf32>
    %321 = arith.mulf %316, %320 : vector<8x4xf32>
    %322 = vector.extract_strided_slice %11 {offsets = [8, 0, 0], sizes = [1, 8, 16], strides = [1, 1, 1]} : vector<16x8x16xf32> to vector<1x8x16xf32>
    %323 = vector.shape_cast %322 : vector<1x8x16xf32> to vector<8x16xf32>
    %324 = vector.extract_strided_slice %321 {offsets = [0, 0], sizes = [8, 1], strides = [1, 1]} : vector<8x4xf32> to vector<8x1xf32>
    %325 = vector.broadcast %324 : vector<8x1xf32> to vector<8x16xf32>
    %326 = vector.broadcast %12 : vector<1x16xf32> to vector<8x16xf32>
    %327 = arith.mulf %325, %326 : vector<8x16xf32>
    %328 = arith.addf %323, %327 : vector<8x16xf32>
    %329 = vector.extract_strided_slice %321 {offsets = [0, 1], sizes = [8, 1], strides = [1, 1]} : vector<8x4xf32> to vector<8x1xf32>
    %330 = vector.broadcast %329 : vector<8x1xf32> to vector<8x16xf32>
    %331 = vector.broadcast %13 : vector<1x16xf32> to vector<8x16xf32>
    %332 = arith.mulf %330, %331 : vector<8x16xf32>
    %333 = arith.addf %328, %332 : vector<8x16xf32>
    %334 = vector.extract_strided_slice %321 {offsets = [0, 2], sizes = [8, 1], strides = [1, 1]} : vector<8x4xf32> to vector<8x1xf32>
    %335 = vector.broadcast %334 : vector<8x1xf32> to vector<8x16xf32>
    %336 = vector.broadcast %14 : vector<1x16xf32> to vector<8x16xf32>
    %337 = arith.mulf %335, %336 : vector<8x16xf32>
    %338 = arith.addf %333, %337 : vector<8x16xf32>
    %339 = vector.extract_strided_slice %321 {offsets = [0, 3], sizes = [8, 1], strides = [1, 1]} : vector<8x4xf32> to vector<8x1xf32>
    %340 = vector.broadcast %339 : vector<8x1xf32> to vector<8x16xf32>
    %341 = vector.broadcast %15 : vector<1x16xf32> to vector<8x16xf32>
    %342 = arith.mulf %340, %341 : vector<8x16xf32>
    %343 = arith.addf %338, %342 : vector<8x16xf32>
    %344 = vector.extract_strided_slice %343 {offsets = [0, 0], sizes = [8, 12], strides = [1, 1]} : vector<8x16xf32> to vector<8x12xf32>
    %345 = arith.negf %344 : vector<8x12xf32>
    %346 = math.exp %345 : vector<8x12xf32>
    %cst_16 = arith.constant 1.000000e+00 : f32
    %347 = vector.broadcast %cst_16 : f32 to vector<8x12xf32>
    %348 = arith.addf %347, %346 : vector<8x12xf32>
    %349 = arith.divf %347, %348 : vector<8x12xf32>
    %350 = vector.extract_strided_slice %343 {offsets = [0, 12], sizes = [8, 4], strides = [1, 1]} : vector<8x16xf32> to vector<8x4xf32>
    %351 = math.tanh %350 : vector<8x4xf32>
    %352 = vector.extract_strided_slice %349 {offsets = [0, 0], sizes = [8, 4], strides = [1, 1]} : vector<8x12xf32> to vector<8x4xf32>
    %353 = vector.extract_strided_slice %349 {offsets = [0, 4], sizes = [8, 4], strides = [1, 1]} : vector<8x12xf32> to vector<8x4xf32>
    %354 = vector.extract_strided_slice %349 {offsets = [0, 8], sizes = [8, 4], strides = [1, 1]} : vector<8x12xf32> to vector<8x4xf32>
    %355 = arith.mulf %353, %319 : vector<8x4xf32>
    %356 = arith.mulf %352, %351 : vector<8x4xf32>
    %357 = arith.addf %355, %356 : vector<8x4xf32>
    %358 = math.tanh %357 : vector<8x4xf32>
    %359 = arith.mulf %354, %358 : vector<8x4xf32>
    %360 = vector.extract_strided_slice %11 {offsets = [9, 0, 0], sizes = [1, 8, 16], strides = [1, 1, 1]} : vector<16x8x16xf32> to vector<1x8x16xf32>
    %361 = vector.shape_cast %360 : vector<1x8x16xf32> to vector<8x16xf32>
    %362 = vector.extract_strided_slice %359 {offsets = [0, 0], sizes = [8, 1], strides = [1, 1]} : vector<8x4xf32> to vector<8x1xf32>
    %363 = vector.broadcast %362 : vector<8x1xf32> to vector<8x16xf32>
    %364 = vector.broadcast %12 : vector<1x16xf32> to vector<8x16xf32>
    %365 = arith.mulf %363, %364 : vector<8x16xf32>
    %366 = arith.addf %361, %365 : vector<8x16xf32>
    %367 = vector.extract_strided_slice %359 {offsets = [0, 1], sizes = [8, 1], strides = [1, 1]} : vector<8x4xf32> to vector<8x1xf32>
    %368 = vector.broadcast %367 : vector<8x1xf32> to vector<8x16xf32>
    %369 = vector.broadcast %13 : vector<1x16xf32> to vector<8x16xf32>
    %370 = arith.mulf %368, %369 : vector<8x16xf32>
    %371 = arith.addf %366, %370 : vector<8x16xf32>
    %372 = vector.extract_strided_slice %359 {offsets = [0, 2], sizes = [8, 1], strides = [1, 1]} : vector<8x4xf32> to vector<8x1xf32>
    %373 = vector.broadcast %372 : vector<8x1xf32> to vector<8x16xf32>
    %374 = vector.broadcast %14 : vector<1x16xf32> to vector<8x16xf32>
    %375 = arith.mulf %373, %374 : vector<8x16xf32>
    %376 = arith.addf %371, %375 : vector<8x16xf32>
    %377 = vector.extract_strided_slice %359 {offsets = [0, 3], sizes = [8, 1], strides = [1, 1]} : vector<8x4xf32> to vector<8x1xf32>
    %378 = vector.broadcast %377 : vector<8x1xf32> to vector<8x16xf32>
    %379 = vector.broadcast %15 : vector<1x16xf32> to vector<8x16xf32>
    %380 = arith.mulf %378, %379 : vector<8x16xf32>
    %381 = arith.addf %376, %380 : vector<8x16xf32>
    %382 = vector.extract_strided_slice %381 {offsets = [0, 0], sizes = [8, 12], strides = [1, 1]} : vector<8x16xf32> to vector<8x12xf32>
    %383 = arith.negf %382 : vector<8x12xf32>
    %384 = math.exp %383 : vector<8x12xf32>
    %cst_17 = arith.constant 1.000000e+00 : f32
    %385 = vector.broadcast %cst_17 : f32 to vector<8x12xf32>
    %386 = arith.addf %385, %384 : vector<8x12xf32>
    %387 = arith.divf %385, %386 : vector<8x12xf32>
    %388 = vector.extract_strided_slice %381 {offsets = [0, 12], sizes = [8, 4], strides = [1, 1]} : vector<8x16xf32> to vector<8x4xf32>
    %389 = math.tanh %388 : vector<8x4xf32>
    %390 = vector.extract_strided_slice %387 {offsets = [0, 0], sizes = [8, 4], strides = [1, 1]} : vector<8x12xf32> to vector<8x4xf32>
    %391 = vector.extract_strided_slice %387 {offsets = [0, 4], sizes = [8, 4], strides = [1, 1]} : vector<8x12xf32> to vector<8x4xf32>
    %392 = vector.extract_strided_slice %387 {offsets = [0, 8], sizes = [8, 4], strides = [1, 1]} : vector<8x12xf32> to vector<8x4xf32>
    %393 = arith.mulf %391, %357 : vector<8x4xf32>
    %394 = arith.mulf %390, %389 : vector<8x4xf32>
    %395 = arith.addf %393, %394 : vector<8x4xf32>
    %396 = math.tanh %395 : vector<8x4xf32>
    %397 = arith.mulf %392, %396 : vector<8x4xf32>
    %398 = vector.extract_strided_slice %11 {offsets = [10, 0, 0], sizes = [1, 8, 16], strides = [1, 1, 1]} : vector<16x8x16xf32> to vector<1x8x16xf32>
    %399 = vector.shape_cast %398 : vector<1x8x16xf32> to vector<8x16xf32>
    %400 = vector.extract_strided_slice %397 {offsets = [0, 0], sizes = [8, 1], strides = [1, 1]} : vector<8x4xf32> to vector<8x1xf32>
    %401 = vector.broadcast %400 : vector<8x1xf32> to vector<8x16xf32>
    %402 = vector.broadcast %12 : vector<1x16xf32> to vector<8x16xf32>
    %403 = arith.mulf %401, %402 : vector<8x16xf32>
    %404 = arith.addf %399, %403 : vector<8x16xf32>
    %405 = vector.extract_strided_slice %397 {offsets = [0, 1], sizes = [8, 1], strides = [1, 1]} : vector<8x4xf32> to vector<8x1xf32>
    %406 = vector.broadcast %405 : vector<8x1xf32> to vector<8x16xf32>
    %407 = vector.broadcast %13 : vector<1x16xf32> to vector<8x16xf32>
    %408 = arith.mulf %406, %407 : vector<8x16xf32>
    %409 = arith.addf %404, %408 : vector<8x16xf32>
    %410 = vector.extract_strided_slice %397 {offsets = [0, 2], sizes = [8, 1], strides = [1, 1]} : vector<8x4xf32> to vector<8x1xf32>
    %411 = vector.broadcast %410 : vector<8x1xf32> to vector<8x16xf32>
    %412 = vector.broadcast %14 : vector<1x16xf32> to vector<8x16xf32>
    %413 = arith.mulf %411, %412 : vector<8x16xf32>
    %414 = arith.addf %409, %413 : vector<8x16xf32>
    %415 = vector.extract_strided_slice %397 {offsets = [0, 3], sizes = [8, 1], strides = [1, 1]} : vector<8x4xf32> to vector<8x1xf32>
    %416 = vector.broadcast %415 : vector<8x1xf32> to vector<8x16xf32>
    %417 = vector.broadcast %15 : vector<1x16xf32> to vector<8x16xf32>
    %418 = arith.mulf %416, %417 : vector<8x16xf32>
    %419 = arith.addf %414, %418 : vector<8x16xf32>
    %420 = vector.extract_strided_slice %419 {offsets = [0, 0], sizes = [8, 12], strides = [1, 1]} : vector<8x16xf32> to vector<8x12xf32>
    %421 = arith.negf %420 : vector<8x12xf32>
    %422 = math.exp %421 : vector<8x12xf32>
    %cst_18 = arith.constant 1.000000e+00 : f32
    %423 = vector.broadcast %cst_18 : f32 to vector<8x12xf32>
    %424 = arith.addf %423, %422 : vector<8x12xf32>
    %425 = arith.divf %423, %424 : vector<8x12xf32>
    %426 = vector.extract_strided_slice %419 {offsets = [0, 12], sizes = [8, 4], strides = [1, 1]} : vector<8x16xf32> to vector<8x4xf32>
    %427 = math.tanh %426 : vector<8x4xf32>
    %428 = vector.extract_strided_slice %425 {offsets = [0, 0], sizes = [8, 4], strides = [1, 1]} : vector<8x12xf32> to vector<8x4xf32>
    %429 = vector.extract_strided_slice %425 {offsets = [0, 4], sizes = [8, 4], strides = [1, 1]} : vector<8x12xf32> to vector<8x4xf32>
    %430 = vector.extract_strided_slice %425 {offsets = [0, 8], sizes = [8, 4], strides = [1, 1]} : vector<8x12xf32> to vector<8x4xf32>
    %431 = arith.mulf %429, %395 : vector<8x4xf32>
    %432 = arith.mulf %428, %427 : vector<8x4xf32>
    %433 = arith.addf %431, %432 : vector<8x4xf32>
    %434 = math.tanh %433 : vector<8x4xf32>
    %435 = arith.mulf %430, %434 : vector<8x4xf32>
    %436 = vector.extract_strided_slice %11 {offsets = [11, 0, 0], sizes = [1, 8, 16], strides = [1, 1, 1]} : vector<16x8x16xf32> to vector<1x8x16xf32>
    %437 = vector.shape_cast %436 : vector<1x8x16xf32> to vector<8x16xf32>
    %438 = vector.extract_strided_slice %435 {offsets = [0, 0], sizes = [8, 1], strides = [1, 1]} : vector<8x4xf32> to vector<8x1xf32>
    %439 = vector.broadcast %438 : vector<8x1xf32> to vector<8x16xf32>
    %440 = vector.broadcast %12 : vector<1x16xf32> to vector<8x16xf32>
    %441 = arith.mulf %439, %440 : vector<8x16xf32>
    %442 = arith.addf %437, %441 : vector<8x16xf32>
    %443 = vector.extract_strided_slice %435 {offsets = [0, 1], sizes = [8, 1], strides = [1, 1]} : vector<8x4xf32> to vector<8x1xf32>
    %444 = vector.broadcast %443 : vector<8x1xf32> to vector<8x16xf32>
    %445 = vector.broadcast %13 : vector<1x16xf32> to vector<8x16xf32>
    %446 = arith.mulf %444, %445 : vector<8x16xf32>
    %447 = arith.addf %442, %446 : vector<8x16xf32>
    %448 = vector.extract_strided_slice %435 {offsets = [0, 2], sizes = [8, 1], strides = [1, 1]} : vector<8x4xf32> to vector<8x1xf32>
    %449 = vector.broadcast %448 : vector<8x1xf32> to vector<8x16xf32>
    %450 = vector.broadcast %14 : vector<1x16xf32> to vector<8x16xf32>
    %451 = arith.mulf %449, %450 : vector<8x16xf32>
    %452 = arith.addf %447, %451 : vector<8x16xf32>
    %453 = vector.extract_strided_slice %435 {offsets = [0, 3], sizes = [8, 1], strides = [1, 1]} : vector<8x4xf32> to vector<8x1xf32>
    %454 = vector.broadcast %453 : vector<8x1xf32> to vector<8x16xf32>
    %455 = vector.broadcast %15 : vector<1x16xf32> to vector<8x16xf32>
    %456 = arith.mulf %454, %455 : vector<8x16xf32>
    %457 = arith.addf %452, %456 : vector<8x16xf32>
    %458 = vector.extract_strided_slice %457 {offsets = [0, 0], sizes = [8, 12], strides = [1, 1]} : vector<8x16xf32> to vector<8x12xf32>
    %459 = arith.negf %458 : vector<8x12xf32>
    %460 = math.exp %459 : vector<8x12xf32>
    %cst_19 = arith.constant 1.000000e+00 : f32
    %461 = vector.broadcast %cst_19 : f32 to vector<8x12xf32>
    %462 = arith.addf %461, %460 : vector<8x12xf32>
    %463 = arith.divf %461, %462 : vector<8x12xf32>
    %464 = vector.extract_strided_slice %457 {offsets = [0, 12], sizes = [8, 4], strides = [1, 1]} : vector<8x16xf32> to vector<8x4xf32>
    %465 = math.tanh %464 : vector<8x4xf32>
    %466 = vector.extract_strided_slice %463 {offsets = [0, 0], sizes = [8, 4], strides = [1, 1]} : vector<8x12xf32> to vector<8x4xf32>
    %467 = vector.extract_strided_slice %463 {offsets = [0, 4], sizes = [8, 4], strides = [1, 1]} : vector<8x12xf32> to vector<8x4xf32>
    %468 = vector.extract_strided_slice %463 {offsets = [0, 8], sizes = [8, 4], strides = [1, 1]} : vector<8x12xf32> to vector<8x4xf32>
    %469 = arith.mulf %467, %433 : vector<8x4xf32>
    %470 = arith.mulf %466, %465 : vector<8x4xf32>
    %471 = arith.addf %469, %470 : vector<8x4xf32>
    %472 = math.tanh %471 : vector<8x4xf32>
    %473 = arith.mulf %468, %472 : vector<8x4xf32>
    %474 = vector.extract_strided_slice %11 {offsets = [12, 0, 0], sizes = [1, 8, 16], strides = [1, 1, 1]} : vector<16x8x16xf32> to vector<1x8x16xf32>
    %475 = vector.shape_cast %474 : vector<1x8x16xf32> to vector<8x16xf32>
    %476 = vector.extract_strided_slice %473 {offsets = [0, 0], sizes = [8, 1], strides = [1, 1]} : vector<8x4xf32> to vector<8x1xf32>
    %477 = vector.broadcast %476 : vector<8x1xf32> to vector<8x16xf32>
    %478 = vector.broadcast %12 : vector<1x16xf32> to vector<8x16xf32>
    %479 = arith.mulf %477, %478 : vector<8x16xf32>
    %480 = arith.addf %475, %479 : vector<8x16xf32>
    %481 = vector.extract_strided_slice %473 {offsets = [0, 1], sizes = [8, 1], strides = [1, 1]} : vector<8x4xf32> to vector<8x1xf32>
    %482 = vector.broadcast %481 : vector<8x1xf32> to vector<8x16xf32>
    %483 = vector.broadcast %13 : vector<1x16xf32> to vector<8x16xf32>
    %484 = arith.mulf %482, %483 : vector<8x16xf32>
    %485 = arith.addf %480, %484 : vector<8x16xf32>
    %486 = vector.extract_strided_slice %473 {offsets = [0, 2], sizes = [8, 1], strides = [1, 1]} : vector<8x4xf32> to vector<8x1xf32>
    %487 = vector.broadcast %486 : vector<8x1xf32> to vector<8x16xf32>
    %488 = vector.broadcast %14 : vector<1x16xf32> to vector<8x16xf32>
    %489 = arith.mulf %487, %488 : vector<8x16xf32>
    %490 = arith.addf %485, %489 : vector<8x16xf32>
    %491 = vector.extract_strided_slice %473 {offsets = [0, 3], sizes = [8, 1], strides = [1, 1]} : vector<8x4xf32> to vector<8x1xf32>
    %492 = vector.broadcast %491 : vector<8x1xf32> to vector<8x16xf32>
    %493 = vector.broadcast %15 : vector<1x16xf32> to vector<8x16xf32>
    %494 = arith.mulf %492, %493 : vector<8x16xf32>
    %495 = arith.addf %490, %494 : vector<8x16xf32>
    %496 = vector.extract_strided_slice %495 {offsets = [0, 0], sizes = [8, 12], strides = [1, 1]} : vector<8x16xf32> to vector<8x12xf32>
    %497 = arith.negf %496 : vector<8x12xf32>
    %498 = math.exp %497 : vector<8x12xf32>
    %cst_20 = arith.constant 1.000000e+00 : f32
    %499 = vector.broadcast %cst_20 : f32 to vector<8x12xf32>
    %500 = arith.addf %499, %498 : vector<8x12xf32>
    %501 = arith.divf %499, %500 : vector<8x12xf32>
    %502 = vector.extract_strided_slice %495 {offsets = [0, 12], sizes = [8, 4], strides = [1, 1]} : vector<8x16xf32> to vector<8x4xf32>
    %503 = math.tanh %502 : vector<8x4xf32>
    %504 = vector.extract_strided_slice %501 {offsets = [0, 0], sizes = [8, 4], strides = [1, 1]} : vector<8x12xf32> to vector<8x4xf32>
    %505 = vector.extract_strided_slice %501 {offsets = [0, 4], sizes = [8, 4], strides = [1, 1]} : vector<8x12xf32> to vector<8x4xf32>
    %506 = vector.extract_strided_slice %501 {offsets = [0, 8], sizes = [8, 4], strides = [1, 1]} : vector<8x12xf32> to vector<8x4xf32>
    %507 = arith.mulf %505, %471 : vector<8x4xf32>
    %508 = arith.mulf %504, %503 : vector<8x4xf32>
    %509 = arith.addf %507, %508 : vector<8x4xf32>
    %510 = math.tanh %509 : vector<8x4xf32>
    %511 = arith.mulf %506, %510 : vector<8x4xf32>
    %512 = vector.extract_strided_slice %11 {offsets = [13, 0, 0], sizes = [1, 8, 16], strides = [1, 1, 1]} : vector<16x8x16xf32> to vector<1x8x16xf32>
    %513 = vector.shape_cast %512 : vector<1x8x16xf32> to vector<8x16xf32>
    %514 = vector.extract_strided_slice %511 {offsets = [0, 0], sizes = [8, 1], strides = [1, 1]} : vector<8x4xf32> to vector<8x1xf32>
    %515 = vector.broadcast %514 : vector<8x1xf32> to vector<8x16xf32>
    %516 = vector.broadcast %12 : vector<1x16xf32> to vector<8x16xf32>
    %517 = arith.mulf %515, %516 : vector<8x16xf32>
    %518 = arith.addf %513, %517 : vector<8x16xf32>
    %519 = vector.extract_strided_slice %511 {offsets = [0, 1], sizes = [8, 1], strides = [1, 1]} : vector<8x4xf32> to vector<8x1xf32>
    %520 = vector.broadcast %519 : vector<8x1xf32> to vector<8x16xf32>
    %521 = vector.broadcast %13 : vector<1x16xf32> to vector<8x16xf32>
    %522 = arith.mulf %520, %521 : vector<8x16xf32>
    %523 = arith.addf %518, %522 : vector<8x16xf32>
    %524 = vector.extract_strided_slice %511 {offsets = [0, 2], sizes = [8, 1], strides = [1, 1]} : vector<8x4xf32> to vector<8x1xf32>
    %525 = vector.broadcast %524 : vector<8x1xf32> to vector<8x16xf32>
    %526 = vector.broadcast %14 : vector<1x16xf32> to vector<8x16xf32>
    %527 = arith.mulf %525, %526 : vector<8x16xf32>
    %528 = arith.addf %523, %527 : vector<8x16xf32>
    %529 = vector.extract_strided_slice %511 {offsets = [0, 3], sizes = [8, 1], strides = [1, 1]} : vector<8x4xf32> to vector<8x1xf32>
    %530 = vector.broadcast %529 : vector<8x1xf32> to vector<8x16xf32>
    %531 = vector.broadcast %15 : vector<1x16xf32> to vector<8x16xf32>
    %532 = arith.mulf %530, %531 : vector<8x16xf32>
    %533 = arith.addf %528, %532 : vector<8x16xf32>
    %534 = vector.extract_strided_slice %533 {offsets = [0, 0], sizes = [8, 12], strides = [1, 1]} : vector<8x16xf32> to vector<8x12xf32>
    %535 = arith.negf %534 : vector<8x12xf32>
    %536 = math.exp %535 : vector<8x12xf32>
    %cst_21 = arith.constant 1.000000e+00 : f32
    %537 = vector.broadcast %cst_21 : f32 to vector<8x12xf32>
    %538 = arith.addf %537, %536 : vector<8x12xf32>
    %539 = arith.divf %537, %538 : vector<8x12xf32>
    %540 = vector.extract_strided_slice %533 {offsets = [0, 12], sizes = [8, 4], strides = [1, 1]} : vector<8x16xf32> to vector<8x4xf32>
    %541 = math.tanh %540 : vector<8x4xf32>
    %542 = vector.extract_strided_slice %539 {offsets = [0, 0], sizes = [8, 4], strides = [1, 1]} : vector<8x12xf32> to vector<8x4xf32>
    %543 = vector.extract_strided_slice %539 {offsets = [0, 4], sizes = [8, 4], strides = [1, 1]} : vector<8x12xf32> to vector<8x4xf32>
    %544 = vector.extract_strided_slice %539 {offsets = [0, 8], sizes = [8, 4], strides = [1, 1]} : vector<8x12xf32> to vector<8x4xf32>
    %545 = arith.mulf %543, %509 : vector<8x4xf32>
    %546 = arith.mulf %542, %541 : vector<8x4xf32>
    %547 = arith.addf %545, %546 : vector<8x4xf32>
    %548 = math.tanh %547 : vector<8x4xf32>
    %549 = arith.mulf %544, %548 : vector<8x4xf32>
    %550 = vector.extract_strided_slice %11 {offsets = [14, 0, 0], sizes = [1, 8, 16], strides = [1, 1, 1]} : vector<16x8x16xf32> to vector<1x8x16xf32>
    %551 = vector.shape_cast %550 : vector<1x8x16xf32> to vector<8x16xf32>
    %552 = vector.extract_strided_slice %549 {offsets = [0, 0], sizes = [8, 1], strides = [1, 1]} : vector<8x4xf32> to vector<8x1xf32>
    %553 = vector.broadcast %552 : vector<8x1xf32> to vector<8x16xf32>
    %554 = vector.broadcast %12 : vector<1x16xf32> to vector<8x16xf32>
    %555 = arith.mulf %553, %554 : vector<8x16xf32>
    %556 = arith.addf %551, %555 : vector<8x16xf32>
    %557 = vector.extract_strided_slice %549 {offsets = [0, 1], sizes = [8, 1], strides = [1, 1]} : vector<8x4xf32> to vector<8x1xf32>
    %558 = vector.broadcast %557 : vector<8x1xf32> to vector<8x16xf32>
    %559 = vector.broadcast %13 : vector<1x16xf32> to vector<8x16xf32>
    %560 = arith.mulf %558, %559 : vector<8x16xf32>
    %561 = arith.addf %556, %560 : vector<8x16xf32>
    %562 = vector.extract_strided_slice %549 {offsets = [0, 2], sizes = [8, 1], strides = [1, 1]} : vector<8x4xf32> to vector<8x1xf32>
    %563 = vector.broadcast %562 : vector<8x1xf32> to vector<8x16xf32>
    %564 = vector.broadcast %14 : vector<1x16xf32> to vector<8x16xf32>
    %565 = arith.mulf %563, %564 : vector<8x16xf32>
    %566 = arith.addf %561, %565 : vector<8x16xf32>
    %567 = vector.extract_strided_slice %549 {offsets = [0, 3], sizes = [8, 1], strides = [1, 1]} : vector<8x4xf32> to vector<8x1xf32>
    %568 = vector.broadcast %567 : vector<8x1xf32> to vector<8x16xf32>
    %569 = vector.broadcast %15 : vector<1x16xf32> to vector<8x16xf32>
    %570 = arith.mulf %568, %569 : vector<8x16xf32>
    %571 = arith.addf %566, %570 : vector<8x16xf32>
    %572 = vector.extract_strided_slice %571 {offsets = [0, 0], sizes = [8, 12], strides = [1, 1]} : vector<8x16xf32> to vector<8x12xf32>
    %573 = arith.negf %572 : vector<8x12xf32>
    %574 = math.exp %573 : vector<8x12xf32>
    %cst_22 = arith.constant 1.000000e+00 : f32
    %575 = vector.broadcast %cst_22 : f32 to vector<8x12xf32>
    %576 = arith.addf %575, %574 : vector<8x12xf32>
    %577 = arith.divf %575, %576 : vector<8x12xf32>
    %578 = vector.extract_strided_slice %571 {offsets = [0, 12], sizes = [8, 4], strides = [1, 1]} : vector<8x16xf32> to vector<8x4xf32>
    %579 = math.tanh %578 : vector<8x4xf32>
    %580 = vector.extract_strided_slice %577 {offsets = [0, 0], sizes = [8, 4], strides = [1, 1]} : vector<8x12xf32> to vector<8x4xf32>
    %581 = vector.extract_strided_slice %577 {offsets = [0, 4], sizes = [8, 4], strides = [1, 1]} : vector<8x12xf32> to vector<8x4xf32>
    %582 = vector.extract_strided_slice %577 {offsets = [0, 8], sizes = [8, 4], strides = [1, 1]} : vector<8x12xf32> to vector<8x4xf32>
    %583 = arith.mulf %581, %547 : vector<8x4xf32>
    %584 = arith.mulf %580, %579 : vector<8x4xf32>
    %585 = arith.addf %583, %584 : vector<8x4xf32>
    %586 = math.tanh %585 : vector<8x4xf32>
    %587 = arith.mulf %582, %586 : vector<8x4xf32>
    %588 = vector.extract_strided_slice %11 {offsets = [15, 0, 0], sizes = [1, 8, 16], strides = [1, 1, 1]} : vector<16x8x16xf32> to vector<1x8x16xf32>
    %589 = vector.shape_cast %588 : vector<1x8x16xf32> to vector<8x16xf32>
    %590 = vector.extract_strided_slice %587 {offsets = [0, 0], sizes = [8, 1], strides = [1, 1]} : vector<8x4xf32> to vector<8x1xf32>
    %591 = vector.broadcast %590 : vector<8x1xf32> to vector<8x16xf32>
    %592 = vector.broadcast %12 : vector<1x16xf32> to vector<8x16xf32>
    %593 = arith.mulf %591, %592 : vector<8x16xf32>
    %594 = arith.addf %589, %593 : vector<8x16xf32>
    %595 = vector.extract_strided_slice %587 {offsets = [0, 1], sizes = [8, 1], strides = [1, 1]} : vector<8x4xf32> to vector<8x1xf32>
    %596 = vector.broadcast %595 : vector<8x1xf32> to vector<8x16xf32>
    %597 = vector.broadcast %13 : vector<1x16xf32> to vector<8x16xf32>
    %598 = arith.mulf %596, %597 : vector<8x16xf32>
    %599 = arith.addf %594, %598 : vector<8x16xf32>
    %600 = vector.extract_strided_slice %587 {offsets = [0, 2], sizes = [8, 1], strides = [1, 1]} : vector<8x4xf32> to vector<8x1xf32>
    %601 = vector.broadcast %600 : vector<8x1xf32> to vector<8x16xf32>
    %602 = vector.broadcast %14 : vector<1x16xf32> to vector<8x16xf32>
    %603 = arith.mulf %601, %602 : vector<8x16xf32>
    %604 = arith.addf %599, %603 : vector<8x16xf32>
    %605 = vector.extract_strided_slice %587 {offsets = [0, 3], sizes = [8, 1], strides = [1, 1]} : vector<8x4xf32> to vector<8x1xf32>
    %606 = vector.broadcast %605 : vector<8x1xf32> to vector<8x16xf32>
    %607 = vector.broadcast %15 : vector<1x16xf32> to vector<8x16xf32>
    %608 = arith.mulf %606, %607 : vector<8x16xf32>
    %609 = arith.addf %604, %608 : vector<8x16xf32>
    %610 = vector.extract_strided_slice %609 {offsets = [0, 0], sizes = [8, 12], strides = [1, 1]} : vector<8x16xf32> to vector<8x12xf32>
    %611 = arith.negf %610 : vector<8x12xf32>
    %612 = math.exp %611 : vector<8x12xf32>
    %cst_23 = arith.constant 1.000000e+00 : f32
    %613 = vector.broadcast %cst_23 : f32 to vector<8x12xf32>
    %614 = arith.addf %613, %612 : vector<8x12xf32>
    %615 = arith.divf %613, %614 : vector<8x12xf32>
    %616 = vector.extract_strided_slice %609 {offsets = [0, 12], sizes = [8, 4], strides = [1, 1]} : vector<8x16xf32> to vector<8x4xf32>
    %617 = math.tanh %616 : vector<8x4xf32>
    %618 = vector.extract_strided_slice %615 {offsets = [0, 0], sizes = [8, 4], strides = [1, 1]} : vector<8x12xf32> to vector<8x4xf32>
    %619 = vector.extract_strided_slice %615 {offsets = [0, 4], sizes = [8, 4], strides = [1, 1]} : vector<8x12xf32> to vector<8x4xf32>
    %620 = vector.extract_strided_slice %615 {offsets = [0, 8], sizes = [8, 4], strides = [1, 1]} : vector<8x12xf32> to vector<8x4xf32>
    %621 = arith.mulf %619, %585 : vector<8x4xf32>
    %622 = arith.mulf %618, %617 : vector<8x4xf32>
    %623 = arith.addf %621, %622 : vector<8x4xf32>
    %624 = math.tanh %623 : vector<8x4xf32>
    %625 = arith.mulf %620, %624 : vector<8x4xf32>
    %c0_24 = arith.constant 0 : index
    %c0_25 = arith.constant 0 : index
    %626 = vector.load %arg4[%c0_24, %c0_25] : memref<4x64xf32, #tpu.memory_space<vmem>>, vector<4x64xf32>
    %cst_26 = arith.constant dense<0.000000e+00> : vector<8x64xf32>
    %627 = tpu.matmul %625, %626, %cst_26 {dimension_numbers = #tpu.dot_dimension_numbers<[1], [0], [0], [1], [0, 0, 1, 1], [], []>} : vector<8x4xf32>, vector<4x64xf32>, vector<8x64xf32> -> vector<8x64xf32>
    %cst_27 = arith.constant 0.000000e+00 : f32
    %628 = vector.broadcast %cst_27 : f32 to vector<8x64xf32>
    %629 = arith.maximumf %627, %628 : vector<8x64xf32>
    %c0_28 = arith.constant 0 : index
    %c0_29 = arith.constant 0 : index
    %630 = vector.load %arg5[%c0_28, %c0_29] : memref<64x1024xf32, #tpu.memory_space<vmem>>, vector<64x1024xf32>
    %cst_30 = arith.constant dense<0.000000e+00> : vector<8x1024xf32>
    %631 = tpu.matmul %629, %630, %cst_30 {dimension_numbers = #tpu.dot_dimension_numbers<[1], [0], [0], [1], [0, 0, 1, 1], [], []>} : vector<8x64xf32>, vector<64x1024xf32>, vector<8x1024xf32> -> vector<8x1024xf32>
    %c0_31 = arith.constant 0 : index
    %c0_32 = arith.constant 0 : index
    %632 = vector.load %arg6[%c0_31, %c0_32] : memref<8x1024xf32, #tpu.memory_space<vmem>>, vector<8x1024xf32>
    tpu.vector_store %arg6[%c0_31, %c0_32], %631 {strides = array<i32>} : memref<8x1024xf32, #tpu.memory_space<vmem>>, vector<8x1024xf32>,
    return
  }
}

</mosaic_0001>

<llo_original>
// kernel: net_forward.1
$region0: #{net_forward.1}
  #allocation0 [shape = 'u32[]', space=smem, size = 0x4, offset = 0x4, fixed_abs, tag = 'smem constant byte address 0x4 - core index']
  #allocation1 [shape = 'u32[144,128]{1,0:T(1,128)}', space=vmem, size = 0x12000, scoped, tag = 'internal scratch']
  %s0 = inlined_call_operand.vmem [shape: f32[16,8], index: 0, kind: input, shape index: {}]
  %s1 = inlined_call_operand.vmem [shape: f32[1,16], index: 1, kind: input, shape index: {}]
  %s2 = inlined_call_operand.vmem [shape: f32[4,16], index: 2, kind: input, shape index: {}]
  %s3 = inlined_call_operand.vmem [shape: f32[1,16], index: 3, kind: input, shape index: {}]
  %s4 = inlined_call_operand.vmem [shape: f32[4,64], index: 4, kind: input, shape index: {}]
  %s5 = inlined_call_operand.hbm [shape: f32[64,1024], index: 5, kind: input, shape index: {}]
  %s6 = inlined_call_operand.hbm [shape: f32[8,1024], index: 6, kind: output, shape index: {}]
  %s7 = sld [smem:[#allocation0]]
  $region38: #{net_forward.1} parent=0
    _
  %s9 = ssub.s32 1, %s7
  %s10 = scalar_select 0, %s9, %s7
  $region1: #{net_forward.1} parent=0
    #allocation2 [shape = 'u8[262144]{0}', space=vmem, size = 0x40000, scoped, tag = 'input window, operand 5, single buffered']
    #allocation3 [shape = 's32[1]{0}', space=sflag, size = 0x4, scoped, tag = 'scoped memory for net_forward.1']
    #allocation4 [shape = 's32[1]{0}', space=sflag, size = 0x4, scoped, tag = 'scoped memory for net_forward.1']
    #allocation5 [shape = 'u8[32768]{0}', space=vmem, size = 0x8000, scoped, tag = 'output window, operand 0, single buffered']
    %11 = vsyncpa [#allocation3], 0
    %12 = vsyncpa [#allocation4], 0
    // Predicated region
    $region2: #{net_forward.1} parent=1 // pred_check
      _
    $region3: #{net_forward.1} parent=1 // pred_check_branch
      %14 = sbr.rel (0) target = $region5
    $region4: #{net_forward.1} parent=1 // pred_region
      _
    $region5: #{net_forward.1} parent=1 // pred_fallthru
      _
    // Predicated region
    $region6: #{net_forward.1} parent=1 // pred_check
      _
    $region7: #{net_forward.1} parent=1 // pred_check_branch
      %16 = sbr.rel (0) target = $region9
    $region8: #{net_forward.1} parent=1 // pred_region
      _
    $region9: #{net_forward.1} parent=1 // pred_fallthru
      _
    // Predicated region
    $region10: #{net_forward.1} parent=1 // pred_check
      _
    $region11: #{net_forward.1} parent=1 // pred_check_branch
      %18 = sbr.rel (0) target = $region13
    $region12: #{net_forward.1} parent=1 // pred_region
      _
    $region13: #{net_forward.1} parent=1 // pred_fallthru
      _
    // Predicated region
    $region14: #{net_forward.1} parent=1 // pred_check
      _
    $region15: #{net_forward.1} parent=1 // pred_check_branch
      %20 = sbr.rel (0) target = $region17
    $region16: #{net_forward.1} parent=1 // pred_region
      _
    $region17: #{net_forward.1} parent=1 // pred_fallthru
      _
    // Predicated region
    $region18: #{net_forward.1} parent=1 // pred_check
      _
    $region19: #{net_forward.1} parent=1 // pred_check_branch
      %22 = sbr.rel (0) target = $region21
    $region20: #{net_forward.1} parent=1 // pred_region
      _
    $region21: #{net_forward.1} parent=1 // pred_fallthru
      _
    // Predicated region
    $region22: #{net_forward.1} parent=1 // pred_check
      _
    $region23: #{net_forward.1} parent=1 // pred_check_branch
      %24 = sbr.rel (0) target = $region25
    $region24: #{net_forward.1} parent=1 // pred_region
      %s26 = ssub.s32 8192, 8192
      %27 = vsyncadd [#allocation3], %s26
      %s28 = sshll.u32 [#allocation2], 4
      %s29 = int_to_ptr.vmem [resolvable:$true] %s28
      %34 = dma.hbm_to_vmem [thread:$0]  %s5, 8192, %s29, [#allocation3], 1024, 1024, 64
    $region25: #{net_forward.1} parent=1 // pred_fallthru
      _
    // Predicated region
    $region26: #{net_forward.1} parent=1 // pred_check
      _
    $region27: #{net_forward.1} parent=1 // pred_check_branch
      %36 = sbr.rel (0) target = $region29
    $region28: #{net_forward.1} parent=1 // pred_region
      %37 = dma.done [#allocation3], 8192
    $region29: #{net_forward.1} parent=1 // pred_fallthru
      _
    %v38 = vld [vmem:[%s1] sm:$0x1]
    %v39 = vld [vmem:[%s2] sm:$0xf]
    %v40 = vld [vmem:[%s3] sm:$0x1]
    %v41 = vld [vmem:[%s0] sm:$0xff]
    %v42 = vld [vmem:[%s0 + $0x8] sm:$0xff]
    %v43 = vlaneseq
    %v44 = vshrl.u32 %v43, 7
    %v45 = vsub.s32 0, %v44
    %v46 = vrot.slane %v41, %v45
    %48 = vbcast.lane.b32.xlu0 %v46, 256
    %v49 = vpop.permute.xlu0 %48
    %v50 = vlaneseq
    %v51 = vshrl.u32 %v50, 7
    %v52 = vsub.s32 1, %v51
    %v53 = vrot.slane %v41, %v52
    %55 = vbcast.lane.b32.xlu0 %v53, 256
    %v56 = vpop.permute.xlu0 %55
    %v57 = vlaneseq
    %v58 = vshrl.u32 %v57, 7
    %v59 = vsub.s32 2, %v58
    %v60 = vrot.slane %v41, %v59
    %62 = vbcast.lane.b32.xlu0 %v60, 256
    %v63 = vpop.permute.xlu0 %62
    %v64 = vlaneseq
    %v65 = vshrl.u32 %v64, 7
    %v66 = vsub.s32 3, %v65
    %v67 = vrot.slane %v41, %v66
    %69 = vbcast.lane.b32.xlu0 %v67, 256
    %v70 = vpop.permute.xlu0 %69
    %v71 = vlaneseq
    %v72 = vshrl.u32 %v71, 7
    %v73 = vsub.s32 4, %v72
    %v74 = vrot.slane %v41, %v73
    %76 = vbcast.lane.b32.xlu0 %v74, 256
    %v77 = vpop.permute.xlu0 %76
    %v78 = vlaneseq
    %v79 = vshrl.u32 %v78, 7
    %v80 = vsub.s32 5, %v79
    %v81 = vrot.slane %v41, %v80
    %83 = vbcast.lane.b32.xlu0 %v81, 256
    %v84 = vpop.permute.xlu0 %83
    %v85 = vlaneseq
    %v86 = vshrl.u32 %v85, 7
    %v87 = vsub.s32 6, %v86
    %v88 = vrot.slane %v41, %v87
    %90 = vbcast.lane.b32.xlu0 %v88, 256
    %v91 = vpop.permute.xlu0 %90
    %v92 = vlaneseq
    %v93 = vshrl.u32 %v92, 7
    %v94 = vsub.s32 7, %v93
    %v95 = vrot.slane %v41, %v94
    %97 = vbcast.lane.b32.xlu0 %v95, 256
    %v98 = vpop.permute.xlu0 %97
    %v99 = vlaneseq
    %v100 = vshrl.u32 %v99, 7
    %v101 = vsub.s32 0, %v100
    %v102 = vrot.slane %v42, %v101
    %104 = vbcast.lane.b32.xlu0 %v102, 256
    %v105 = vpop.permute.xlu0 %104
    %v106 = vlaneseq
    %v107 = vshrl.u32 %v106, 7
    %v108 = vsub.s32 1, %v107
    %v109 = vrot.slane %v42, %v108
    %111 = vbcast.lane.b32.xlu0 %v109, 256
    %v112 = vpop.permute.xlu0 %111
    %v113 = vlaneseq
    %v114 = vshrl.u32 %v113, 7
    %v115 = vsub.s32 2, %v114
    %v116 = vrot.slane %v42, %v115
    %118 = vbcast.lane.b32.xlu0 %v116, 256
    %v119 = vpop.permute.xlu0 %118
    %v120 = vlaneseq
    %v121 = vshrl.u32 %v120, 7
    %v122 = vsub.s32 3, %v121
    %v123 = vrot.slane %v42, %v122
    %125 = vbcast.lane.b32.xlu0 %v123, 256
    %v126 = vpop.permute.xlu0 %125
    %v127 = vlaneseq
    %v128 = vshrl.u32 %v127, 7
    %v129 = vsub.s32 4, %v128
    %v130 = vrot.slane %v42, %v129
    %132 = vbcast.lane.b32.xlu0 %v130, 256
    %v133 = vpop.permute.xlu0 %132
    %v134 = vlaneseq
    %v135 = vshrl.u32 %v134, 7
    %v136 = vsub.s32 5, %v135
    %v137 = vrot.slane %v42, %v136
    %139 = vbcast.lane.b32.xlu0 %v137, 256
    %v140 = vpop.permute.xlu0 %139
    %v141 = vlaneseq
    %v142 = vshrl.u32 %v141, 7
    %v143 = vsub.s32 6, %v142
    %v144 = vrot.slane %v42, %v143
    %146 = vbcast.lane.b32.xlu0 %v144, 256
    %v147 = vpop.permute.xlu0 %146
    %v148 = vlaneseq
    %v149 = vshrl.u32 %v148, 7
    %v150 = vsub.s32 7, %v149
    %v151 = vrot.slane %v42, %v150
    %153 = vbcast.lane.b32.xlu0 %v151, 256
    %v154 = vpop.permute.xlu0 %153
    %v156 = vlaneseq
    %v157 = vshrl.u32 %v156, 7
    %v158 = vsub.s32 0, %v157
    %v159 = vrot.slane %v38, %v158
    %v161 = vmul.f32 %v49, %v159
    %v162 = vmul.f32 %v56, %v159
    %v163 = vmul.f32 %v63, %v159
    %v164 = vmul.f32 %v70, %v159
    %v165 = vmul.f32 %v77, %v159
    %v166 = vmul.f32 %v84, %v159
    %v167 = vmul.f32 %v91, %v159
    %v168 = vmul.f32 %v98, %v159
    %v169 = vmul.f32 %v105, %v159
    %v170 = vmul.f32 %v112, %v159
    %v171 = vmul.f32 %v119, %v159
    %v172 = vmul.f32 %v126, %v159
    %v173 = vmul.f32 %v133, %v159
    %v174 = vmul.f32 %v140, %v159
    %v175 = vmul.f32 %v147, %v159
    %v176 = vmul.f32 %v154, %v159
    %v178 = vlaneseq
    %v179 = vshrl.u32 %v178, 7
    %v180 = vsub.s32 0, %v179
    %v181 = vrot.slane %v40, %v180
    %v183 = vadd.f32 %v161, %v181
    %v184 = vadd.f32 %v162, %v181
    %v185 = vadd.f32 %v163, %v181
    %v186 = vadd.f32 %v164, %v181
    %v187 = vadd.f32 %v165, %v181
    %v188 = vadd.f32 %v166, %v181
    %v189 = vadd.f32 %v167, %v181
    %v190 = vadd.f32 %v168, %v181
    %v191 = vadd.f32 %v169, %v181
    %v192 = vadd.f32 %v170, %v181
    %v193 = vadd.f32 %v171, %v181
    %v194 = vadd.f32 %v172, %v181
    %v195 = vadd.f32 %v173, %v181
    %v196 = vadd.f32 %v174, %v181
    %v197 = vadd.f32 %v175, %v181
    %v198 = vadd.f32 %v176, %v181
    %v199 = vlaneseq
    %v200 = vshrl.u32 %v199, 7
    %v201 = vsub.s32 0, %v200
    %v202 = vrot.slane %v39, %v201
    %v203 = vmul.f32 %v202, 0.0
    %v204 = vadd.f32 %v183, %v203
    %v205 = vlaneseq
    %v206 = vshrl.u32 %v205, 7
    %v207 = vsub.s32 1, %v206
    %v208 = vrot.slane %v39, %v207
    %v209 = vmul.f32 %v208, 0.0
    %v210 = vadd.f32 %v204, %v209
    %v211 = vlaneseq
    %v212 = vshrl.u32 %v211, 7
    %v213 = vsub.s32 2, %v212
    %v214 = vrot.slane %v39, %v213
    %v215 = vmul.f32 %v214, 0.0
    %v216 = vadd.f32 %v210, %v215
    %v217 = vlaneseq
    %v218 = vshrl.u32 %v217, 7
    %v219 = vsub.s32 3, %v218
    %v220 = vrot.slane %v39, %v219
    %v221 = vmul.f32 %v220, 0.0
    %v222 = vadd.f32 %v216, %v221
    %v223 = vxor.u32 %v222, 2147483648
    %v224 = vmul.f32 %v223, 1.442695
    %v225 = vpow.pop %v224
    %v226 = vadd.f32 %v225, 1.0
    %v227 = vrcp.pop %v226
    %v228 = vmul.f32 1.0, %v227
    %v229 = vtanh.pop %v222
    %v230 = vmul.f32 %v228, 0.0
    %232 = vrot.lane.b32.xlu0 %v229, 116
    %v233 = vpop.permute.xlu0 %232
    %v235 = vmul.f32 %v228, %v233
    %237 = vrot.lane.b32.xlu0 %v235, 4
    %v238 = vpop.permute.xlu0 %237
    %v240 = vadd.f32 %v230, %v238
    %v241 = vtanh.pop %v240
    %243 = vrot.lane.b32.xlu0 %v241, 4
    %v244 = vpop.permute.xlu0 %243
    %v246 = vmul.f32 %v228, %v244
    %248 = vset.pattern.permute.xlu0 8
    %249 = vperm.xlu0 %248, %v246
    %v250 = vpop.permute.xlu0 %249
    %v252 = vmul.f32 %v250, %v202
    %v253 = vadd.f32 %v184, %v252
    %254 = vset.pattern.permute.xlu0 9
    %255 = vperm.xlu0 %254, %v246
    %v256 = vpop.permute.xlu0 %255
    %v258 = vmul.f32 %v256, %v208
    %v259 = vadd.f32 %v253, %v258
    %260 = vset.pattern.permute.xlu0 10
    %261 = vperm.xlu0 %260, %v246
    %v262 = vpop.permute.xlu0 %261
    %v264 = vmul.f32 %v262, %v214
    %v265 = vadd.f32 %v259, %v264
    %266 = vset.pattern.permute.xlu0 11
    %267 = vperm.xlu0 %266, %v246
    %v268 = vpop.permute.xlu0 %267
    %v270 = vmul.f32 %v268, %v220
    %v271 = vadd.f32 %v265, %v270
    %v272 = vxor.u32 %v271, 2147483648
    %v273 = vmul.f32 %v272, 1.442695
    %v274 = vpow.pop %v273
    %v275 = vadd.f32 %v274, 1.0
    %v276 = vrcp.pop %v275
    %v277 = vmul.f32 1.0, %v276
    %v278 = vtanh.pop %v271
    %v279 = vmul.f32 %v277, %v240
    %281 = vrot.lane.b32.xlu0 %v278, 116
    %v282 = vpop.permute.xlu0 %281
    %v284 = vmul.f32 %v277, %v282
    %286 = vrot.lane.b32.xlu0 %v284, 4
    %v287 = vpop.permute.xlu0 %286
    %v289 = vadd.f32 %v279, %v287
    %v290 = vtanh.pop %v289
    %292 = vrot.lane.b32.xlu0 %v290, 4
    %v293 = vpop.permute.xlu0 %292
    %v295 = vmul.f32 %v277, %v293
    %297 = vset.pattern.permute.xlu0 8
    %298 = vperm.xlu0 %297, %v295
    %v299 = vpop.permute.xlu0 %298
    %v301 = vmul.f32 %v299, %v202
    %v302 = vadd.f32 %v185, %v301
    %303 = vset.pattern.permute.xlu0 9
    %304 = vperm.xlu0 %303, %v295
    %v305 = vpop.permute.xlu0 %304
    %v307 = vmul.f32 %v305, %v208
    %v308 = vadd.f32 %v302, %v307
    %309 = vset.pattern.permute.xlu0 10
    %310 = vperm.xlu0 %309, %v295
    %v311 = vpop.permute.xlu0 %310
    %v313 = vmul.f32 %v311, %v214
    %v314 = vadd.f32 %v308, %v313
    %315 = vset.pattern.permute.xlu0 11
    %316 = vperm.xlu0 %315, %v295
    %v317 = vpop.permute.xlu0 %316
    %v319 = vmul.f32 %v317, %v220
    %v320 = vadd.f32 %v314, %v319
    %v321 = vxor.u32 %v320, 2147483648
    %v322 = vmul.f32 %v321, 1.442695
    %v323 = vpow.pop %v322
    %v324 = vadd.f32 %v323, 1.0
    %v325 = vrcp.pop %v324
    %v326 = vmul.f32 1.0, %v325
    %v327 = vtanh.pop %v320
    %v328 = vmul.f32 %v326, %v289
    %330 = vrot.lane.b32.xlu0 %v327, 116
    %v331 = vpop.permute.xlu0 %330
    %v333 = vmul.f32 %v326, %v331
    %335 = vrot.lane.b32.xlu0 %v333, 4
    %v336 = vpop.permute.xlu0 %335
    %v338 = vadd.f32 %v328, %v336
    %v339 = vtanh.pop %v338
    %341 = vrot.lane.b32.xlu0 %v339, 4
    %v342 = vpop.permute.xlu0 %341
    %v344 = vmul.f32 %v326, %v342
    %346 = vset.pattern.permute.xlu0 8
    %347 = vperm.xlu0 %346, %v344
    %v348 = vpop.permute.xlu0 %347
    %v350 = vmul.f32 %v348, %v202
    %v351 = vadd.f32 %v186, %v350
    %352 = vset.pattern.permute.xlu0 9
    %353 = vperm.xlu0 %352, %v344
    %v354 = vpop.permute.xlu0 %353
    %v356 = vmul.f32 %v354, %v208
    %v357 = vadd.f32 %v351, %v356
    %358 = vset.pattern.permute.xlu0 10
    %359 = vperm.xlu0 %358, %v344
    %v360 = vpop.permute.xlu0 %359
    %v362 = vmul.f32 %v360, %v214
    %v363 = vadd.f32 %v357, %v362
    %364 = vset.pattern.permute.xlu0 11
    %365 = vperm.xlu0 %364, %v344
    %v366 = vpop.permute.xlu0 %365
    %v368 = vmul.f32 %v366, %v220
    %v369 = vadd.f32 %v363, %v368
    %v370 = vxor.u32 %v369, 2147483648
    %v371 = vmul.f32 %v370, 1.442695
    %v372 = vpow.pop %v371
    %v373 = vadd.f32 %v372, 1.0
    %v374 = vrcp.pop %v373
    %v375 = vmul.f32 1.0, %v374
    %v376 = vtanh.pop %v369
    %v377 = vmul.f32 %v375, %v338
    %379 = vrot.lane.b32.xlu0 %v376, 116
    %v380 = vpop.permute.xlu0 %379
    %v382 = vmul.f32 %v375, %v380
    %384 = vrot.lane.b32.xlu0 %v382, 4
    %v385 = vpop.permute.xlu0 %384
    %v387 = vadd.f32 %v377, %v385
    %v388 = vtanh.pop %v387
    %390 = vrot.lane.b32.xlu0 %v388, 4
    %v391 = vpop.permute.xlu0 %390
    %v393 = vmul.f32 %v375, %v391
    %395 = vset.pattern.permute.xlu0 8
    %396 = vperm.xlu0 %395, %v393
    %v397 = vpop.permute.xlu0 %396
    %v399 = vmul.f32 %v397, %v202
    %v400 = vadd.f32 %v187, %v399
    %401 = vset.pattern.permute.xlu0 9
    %402 = vperm.xlu0 %401, %v393
    %v403 = vpop.permute.xlu0 %402
    %v405 = vmul.f32 %v403, %v208
    %v406 = vadd.f32 %v400, %v405
    %407 = vset.pattern.permute.xlu0 10
    %408 = vperm.xlu0 %407, %v393
    %v409 = vpop.permute.xlu0 %408
    %v411 = vmul.f32 %v409, %v214
    %v412 = vadd.f32 %v406, %v411
    %413 = vset.pattern.permute.xlu0 11
    %414 = vperm.xlu0 %413, %v393
    %v415 = vpop.permute.xlu0 %414
    %v417 = vmul.f32 %v415, %v220
    %v418 = vadd.f32 %v412, %v417
    %v419 = vxor.u32 %v418, 2147483648
    %v420 = vmul.f32 %v419, 1.442695
    %v421 = vpow.pop %v420
    %v422 = vadd.f32 %v421, 1.0
    %v423 = vrcp.pop %v422
    %v424 = vmul.f32 1.0, %v423
    %v425 = vtanh.pop %v418
    %v426 = vmul.f32 %v424, %v387
    %428 = vrot.lane.b32.xlu0 %v425, 116
    %v429 = vpop.permute.xlu0 %428
    %v431 = vmul.f32 %v424, %v429
    %433 = vrot.lane.b32.xlu0 %v431, 4
    %v434 = vpop.permute.xlu0 %433
    %v436 = vadd.f32 %v426, %v434
    %v437 = vtanh.pop %v436
    %439 = vrot.lane.b32.xlu0 %v437, 4
    %v440 = vpop.permute.xlu0 %439
    %v442 = vmul.f32 %v424, %v440
    %444 = vset.pattern.permute.xlu0 8
    %445 = vperm.xlu0 %444, %v442
    %v446 = vpop.permute.xlu0 %445
    %v448 = vmul.f32 %v446, %v202
    %v449 = vadd.f32 %v188, %v448
    %450 = vset.pattern.permute.xlu0 9
    %451 = vperm.xlu0 %450, %v442
    %v452 = vpop.permute.xlu0 %451
    %v454 = vmul.f32 %v452, %v208
    %v455 = vadd.f32 %v449, %v454
    %456 = vset.pattern.permute.xlu0 10
    %457 = vperm.xlu0 %456, %v442
    %v458 = vpop.permute.xlu0 %457
    %v460 = vmul.f32 %v458, %v214
    %v461 = vadd.f32 %v455, %v460
    %462 = vset.pattern.permute.xlu0 11
    %463 = vperm.xlu0 %462, %v442
    %v464 = vpop.permute.xlu0 %463
    %v466 = vmul.f32 %v464, %v220
    %v467 = vadd.f32 %v461, %v466
    %v468 = vxor.u32 %v467, 2147483648
    %v469 = vmul.f32 %v468, 1.442695
    %v470 = vpow.pop %v469
    %v471 = vadd.f32 %v470, 1.0
    %v472 = vrcp.pop %v471
    %v473 = vmul.f32 1.0, %v472
    %v474 = vtanh.pop %v467
    %v475 = vmul.f32 %v473, %v436
    %477 = vrot.lane.b32.xlu0 %v474, 116
    %v478 = vpop.permute.xlu0 %477
    %v480 = vmul.f32 %v473, %v478
    %482 = vrot.lane.b32.xlu0 %v480, 4
    %v483 = vpop.permute.xlu0 %482
    %v485 = vadd.f32 %v475, %v483
    %v486 = vtanh.pop %v485
    %488 = vrot.lane.b32.xlu0 %v486, 4
    %v489 = vpop.permute.xlu0 %488
    %v491 = vmul.f32 %v473, %v489
    %493 = vset.pattern.permute.xlu0 8
    %494 = vperm.xlu0 %493, %v491
    %v495 = vpop.permute.xlu0 %494
    %v497 = vmul.f32 %v495, %v202
    %v498 = vadd.f32 %v189, %v497
    %499 = vset.pattern.permute.xlu0 9
    %500 = vperm.xlu0 %499, %v491
    %v501 = vpop.permute.xlu0 %500
    %v503 = vmul.f32 %v501, %v208
    %v504 = vadd.f32 %v498, %v503
    %505 = vset.pattern.permute.xlu0 10
    %506 = vperm.xlu0 %505, %v491
    %v507 = vpop.permute.xlu0 %506
    %v509 = vmul.f32 %v507, %v214
    %v510 = vadd.f32 %v504, %v509
    %511 = vset.pattern.permute.xlu0 11
    %512 = vperm.xlu0 %511, %v491
    %v513 = vpop.permute.xlu0 %512
    %v515 = vmul.f32 %v513, %v220
    %v516 = vadd.f32 %v510, %v515
    %v517 = vxor.u32 %v516, 2147483648
    %v518 = vmul.f32 %v517, 1.442695
    %v519 = vpow.pop %v518
    %v520 = vadd.f32 %v519, 1.0
    %v521 = vrcp.pop %v520
    %v522 = vmul.f32 1.0, %v521
    %v523 = vtanh.pop %v516
    %v524 = vmul.f32 %v522, %v485
    %526 = vrot.lane.b32.xlu0 %v523, 116
    %v527 = vpop.permute.xlu0 %526
    %v529 = vmul.f32 %v522, %v527
    %531 = vrot.lane.b32.xlu0 %v529, 4
    %v532 = vpop.permute.xlu0 %531
    %v534 = vadd.f32 %v524, %v532
    %v535 = vtanh.pop %v534
    %537 = vrot.lane.b32.xlu0 %v535, 4
    %v538 = vpop.permute.xlu0 %537
    %v540 = vmul.f32 %v522, %v538
    %542 = vset.pattern.permute.xlu0 8
    %543 = vperm.xlu0 %542, %v540
    %v544 = vpop.permute.xlu0 %543
    %v546 = vmul.f32 %v544, %v202
    %v547 = vadd.f32 %v190, %v546
    %548 = vset.pattern.permute.xlu0 9
    %549 = vperm.xlu0 %548, %v540
    %v550 = vpop.permute.xlu0 %549
    %v552 = vmul.f32 %v550, %v208
    %v553 = vadd.f32 %v547, %v552
    %554 = vset.pattern.permute.xlu0 10
    %555 = vperm.xlu0 %554, %v540
    %v556 = vpop.permute.xlu0 %555
    %v558 = vmul.f32 %v556, %v214
    %v559 = vadd.f32 %v553, %v558
    %560 = vset.pattern.permute.xlu0 11
    %561 = vperm.xlu0 %560, %v540
    %v562 = vpop.permute.xlu0 %561
    %v564 = vmul.f32 %v562, %v220
    %v565 = vadd.f32 %v559, %v564
    %v566 = vxor.u32 %v565, 2147483648
    %v567 = vmul.f32 %v566, 1.442695
    %v568 = vpow.pop %v567
    %v569 = vadd.f32 %v568, 1.0
    %v570 = vrcp.pop %v569
    %v571 = vmul.f32 1.0, %v570
    %v572 = vtanh.pop %v565
    %v573 = vmul.f32 %v571, %v534
    %575 = vrot.lane.b32.xlu0 %v572, 116
    %v576 = vpop.permute.xlu0 %575
    %v578 = vmul.f32 %v571, %v576
    %580 = vrot.lane.b32.xlu0 %v578, 4
    %v581 = vpop.permute.xlu0 %580
    %v583 = vadd.f32 %v573, %v581
    %v584 = vtanh.pop %v583
    %586 = vrot.lane.b32.xlu0 %v584, 4
    %v587 = vpop.permute.xlu0 %586
    %v589 = vmul.f32 %v571, %v587
    %591 = vset.pattern.permute.xlu0 8
    %592 = vperm.xlu0 %591, %v589
    %v593 = vpop.permute.xlu0 %592
    %v595 = vmul.f32 %v593, %v202
    %v596 = vadd.f32 %v191, %v595
    %597 = vset.pattern.permute.xlu0 9
    %598 = vperm.xlu0 %597, %v589
    %v599 = vpop.permute.xlu0 %598
    %v601 = vmul.f32 %v599, %v208
    %v602 = vadd.f32 %v596, %v601
    %603 = vset.pattern.permute.xlu0 10
    %604 = vperm.xlu0 %603, %v589
    %v605 = vpop.permute.xlu0 %604
    %v607 = vmul.f32 %v605, %v214
    %v608 = vadd.f32 %v602, %v607
    %609 = vset.pattern.permute.xlu0 11
    %610 = vperm.xlu0 %609, %v589
    %v611 = vpop.permute.xlu0 %610
    %v613 = vmul.f32 %v611, %v220
    %v614 = vadd.f32 %v608, %v613
    %v615 = vxor.u32 %v614, 2147483648
    %v616 = vmul.f32 %v615, 1.442695
    %v617 = vpow.pop %v616
    %v618 = vadd.f32 %v617, 1.0
    %v619 = vrcp.pop %v618
    %v620 = vmul.f32 1.0, %v619
    %v621 = vtanh.pop %v614
    %v622 = vmul.f32 %v620, %v583
    %624 = vrot.lane.b32.xlu0 %v621, 116
    %v625 = vpop.permute.xlu0 %624
    %v627 = vmul.f32 %v620, %v625
    %629 = vrot.lane.b32.xlu0 %v627, 4
    %v630 = vpop.permute.xlu0 %629
    %v632 = vadd.f32 %v622, %v630
    %v633 = vtanh.pop %v632
    %635 = vrot.lane.b32.xlu0 %v633, 4
    %v636 = vpop.permute.xlu0 %635
    %v638 = vmul.f32 %v620, %v636
    %640 = vset.pattern.permute.xlu0 8
    %641 = vperm.xlu0 %640, %v638
    %v642 = vpop.permute.xlu0 %641
    %v644 = vmul.f32 %v642, %v202
    %v645 = vadd.f32 %v192, %v644
    %646 = vset.pattern.permute.xlu0 9
    %647 = vperm.xlu0 %646, %v638
    %v648 = vpop.permute.xlu0 %647
    %v650 = vmul.f32 %v648, %v208
    %v651 = vadd.f32 %v645, %v650
    %652 = vset.pattern.permute.xlu0 10
    %653 = vperm.xlu0 %652, %v638
    %v654 = vpop.permute.xlu0 %653
    %v656 = vmul.f32 %v654, %v214
    %v657 = vadd.f32 %v651, %v656
    %658 = vset.pattern.permute.xlu0 11
    %659 = vperm.xlu0 %658, %v638
    %v660 = vpop.permute.xlu0 %659
    %v662 = vmul.f32 %v660, %v220
    %v663 = vadd.f32 %v657, %v662
    %v664 = vxor.u32 %v663, 2147483648
    %v665 = vmul.f32 %v664, 1.442695
    %v666 = vpow.pop %v665
    %v667 = vadd.f32 %v666, 1.0
    %v668 = vrcp.pop %v667
    %v669 = vmul.f32 1.0, %v668
    %v670 = vtanh.pop %v663
    %v671 = vmul.f32 %v669, %v632
    %673 = vrot.lane.b32.xlu0 %v670, 116
    %v674 = vpop.permute.xlu0 %673
    %v676 = vmul.f32 %v669, %v674
    %678 = vrot.lane.b32.xlu0 %v676, 4
    %v679 = vpop.permute.xlu0 %678
    %v681 = vadd.f32 %v671, %v679
    %v682 = vtanh.pop %v681
    %684 = vrot.lane.b32.xlu0 %v682, 4
    %v685 = vpop.permute.xlu0 %684
    %v687 = vmul.f32 %v669, %v685
    %689 = vset.pattern.permute.xlu0 8
    %690 = vperm.xlu0 %689, %v687
    %v691 = vpop.permute.xlu0 %690
    %v693 = vmul.f32 %v691, %v202
    %v694 = vadd.f32 %v193, %v693
    %695 = vset.pattern.permute.xlu0 9
    %696 = vperm.xlu0 %695, %v687
    %v697 = vpop.permute.xlu0 %696
    %v699 = vmul.f32 %v697, %v208
    %v700 = vadd.f32 %v694, %v699
    %701 = vset.pattern.permute.xlu0 10
    %702 = vperm.xlu0 %701, %v687
    %v703 = vpop.permute.xlu0 %702
    %v705 = vmul.f32 %v703, %v214
    %v706 = vadd.f32 %v700, %v705
    %707 = vset.pattern.permute.xlu0 11
    %708 = vperm.xlu0 %707, %v687
    %v709 = vpop.permute.xlu0 %708
    %v711 = vmul.f32 %v709, %v220
    %v712 = vadd.f32 %v706, %v711
    %v713 = vxor.u32 %v712, 2147483648
    %v714 = vmul.f32 %v713, 1.442695
    %v715 = vpow.pop %v714
    %v716 = vadd.f32 %v715, 1.0
    %v717 = vrcp.pop %v716
    %v718 = vmul.f32 1.0, %v717
    %v719 = vtanh.pop %v712
    %v720 = vmul.f32 %v718, %v681
    %722 = vrot.lane.b32.xlu0 %v719, 116
    %v723 = vpop.permute.xlu0 %722
    %v725 = vmul.f32 %v718, %v723
    %727 = vrot.lane.b32.xlu0 %v725, 4
    %v728 = vpop.permute.xlu0 %727
    %v730 = vadd.f32 %v720, %v728
    %v731 = vtanh.pop %v730
    %733 = vrot.lane.b32.xlu0 %v731, 4
    %v734 = vpop.permute.xlu0 %733
    %v736 = vmul.f32 %v718, %v734
    %738 = vset.pattern.permute.xlu0 8
    %739 = vperm.xlu0 %738, %v736
    %v740 = vpop.permute.xlu0 %739
    %v742 = vmul.f32 %v740, %v202
    %v743 = vadd.f32 %v194, %v742
    %744 = vset.pattern.permute.xlu0 9
    %745 = vperm.xlu0 %744, %v736
    %v746 = vpop.permute.xlu0 %745
    %v748 = vmul.f32 %v746, %v208
    %v749 = vadd.f32 %v743, %v748
    %750 = vset.pattern.permute.xlu0 10
    %751 = vperm.xlu0 %750, %v736
    %v752 = vpop.permute.xlu0 %751
    %v754 = vmul.f32 %v752, %v214
    %v755 = vadd.f32 %v749, %v754
    %756 = vset.pattern.permute.xlu0 11
    %757 = vperm.xlu0 %756, %v736
    %v758 = vpop.permute.xlu0 %757
    %v760 = vmul.f32 %v758, %v220
    %v761 = vadd.f32 %v755, %v760
    %v762 = vxor.u32 %v761, 2147483648
    %v763 = vmul.f32 %v762, 1.442695
    %v764 = vpow.pop %v763
    %v765 = vadd.f32 %v764, 1.0
    %v766 = vrcp.pop %v765
    %v767 = vmul.f32 1.0, %v766
    %v768 = vtanh.pop %v761
    %v769 = vmul.f32 %v767, %v730
    %771 = vrot.lane.b32.xlu0 %v768, 116
    %v772 = vpop.permute.xlu0 %771
    %v774 = vmul.f32 %v767, %v772
    %776 = vrot.lane.b32.xlu0 %v774, 4
    %v777 = vpop.permute.xlu0 %776
    %v779 = vadd.f32 %v769, %v777
    %v780 = vtanh.pop %v779
    %782 = vrot.lane.b32.xlu0 %v780, 4
    %v783 = vpop.permute.xlu0 %782
    %v785 = vmul.f32 %v767, %v783
    %787 = vset.pattern.permute.xlu0 8
    %788 = vperm.xlu0 %787, %v785
    %v789 = vpop.permute.xlu0 %788
    %v791 = vmul.f32 %v789, %v202
    %v792 = vadd.f32 %v195, %v791
    %793 = vset.pattern.permute.xlu0 9
    %794 = vperm.xlu0 %793, %v785
    %v795 = vpop.permute.xlu0 %794
    %v797 = vmul.f32 %v795, %v208
    %v798 = vadd.f32 %v792, %v797
    %799 = vset.pattern.permute.xlu0 10
    %800 = vperm.xlu0 %799, %v785
    %v801 = vpop.permute.xlu0 %800
    %v803 = vmul.f32 %v801, %v214
    %v804 = vadd.f32 %v798, %v803
    %805 = vset.pattern.permute.xlu0 11
    %806 = vperm.xlu0 %805, %v785
    %v807 = vpop.permute.xlu0 %806
    %v809 = vmul.f32 %v807, %v220
    %v810 = vadd.f32 %v804, %v809
    %v811 = vxor.u32 %v810, 2147483648
    %v812 = vmul.f32 %v811, 1.442695
    %v813 = vpow.pop %v812
    %v814 = vadd.f32 %v813, 1.0
    %v815 = vrcp.pop %v814
    %v816 = vmul.f32 1.0, %v815
    %v817 = vtanh.pop %v810
    %v818 = vmul.f32 %v816, %v779
    %820 = vrot.lane.b32.xlu0 %v817, 116
    %v821 = vpop.permute.xlu0 %820
    %v823 = vmul.f32 %v816, %v821
    %825 = vrot.lane.b32.xlu0 %v823, 4
    %v826 = vpop.permute.xlu0 %825
    %v828 = vadd.f32 %v818, %v826
    %v829 = vtanh.pop %v828
    %831 = vrot.lane.b32.xlu0 %v829, 4
    %v832 = vpop.permute.xlu0 %831
    %v834 = vmul.f32 %v816, %v832
    %836 = vset.pattern.permute.xlu0 8
    %837 = vperm.xlu0 %836, %v834
    %v838 = vpop.permute.xlu0 %837
    %v840 = vmul.f32 %v838, %v202
    %v841 = vadd.f32 %v196, %v840
    %842 = vset.pattern.permute.xlu0 9
    %843 = vperm.xlu0 %842, %v834
    %v844 = vpop.permute.xlu0 %843
    %v846 = vmul.f32 %v844, %v208
    %v847 = vadd.f32 %v841, %v846
    %848 = vset.pattern.permute.xlu0 10
    %849 = vperm.xlu0 %848, %v834
    %v850 = vpop.permute.xlu0 %849
    %v852 = vmul.f32 %v850, %v214
    %v853 = vadd.f32 %v847, %v852
    %854 = vset.pattern.permute.xlu0 11
    %855 = vperm.xlu0 %854, %v834
    %v856 = vpop.permute.xlu0 %855
    %v858 = vmul.f32 %v856, %v220
    %v859 = vadd.f32 %v853, %v858
    %v860 = vxor.u32 %v859, 2147483648
    %v861 = vmul.f32 %v860, 1.442695
    %v862 = vpow.pop %v861
    %v863 = vadd.f32 %v862, 1.0
    %v864 = vrcp.pop %v863
    %v865 = vmul.f32 1.0, %v864
    %v866 = vtanh.pop %v859
    %v867 = vmul.f32 %v865, %v828
    %869 = vrot.lane.b32.xlu0 %v866, 116
    %v870 = vpop.permute.xlu0 %869
    %v872 = vmul.f32 %v865, %v870
    %874 = vrot.lane.b32.xlu0 %v872, 4
    %v875 = vpop.permute.xlu0 %874
    %v877 = vadd.f32 %v867, %v875
    %v878 = vtanh.pop %v877
    %880 = vrot.lane.b32.xlu0 %v878, 4
    %v881 = vpop.permute.xlu0 %880
    %v883 = vmul.f32 %v865, %v881
    %885 = vset.pattern.permute.xlu0 8
    %886 = vperm.xlu0 %885, %v883
    %v887 = vpop.permute.xlu0 %886
    %v889 = vmul.f32 %v887, %v202
    %v890 = vadd.f32 %v197, %v889
    %891 = vset.pattern.permute.xlu0 9
    %892 = vperm.xlu0 %891, %v883
    %v893 = vpop.permute.xlu0 %892
    %v895 = vmul.f32 %v893, %v208
    %v896 = vadd.f32 %v890, %v895
    %897 = vset.pattern.permute.xlu0 10
    %898 = vperm.xlu0 %897, %v883
    %v899 = vpop.permute.xlu0 %898
    %v901 = vmul.f32 %v899, %v214
    %v902 = vadd.f32 %v896, %v901
    %903 = vset.pattern.permute.xlu0 11
    %904 = vperm.xlu0 %903, %v883
    %v905 = vpop.permute.xlu0 %904
    %v907 = vmul.f32 %v905, %v220
    %v908 = vadd.f32 %v902, %v907
    %v909 = vxor.u32 %v908, 2147483648
    %v910 = vmul.f32 %v909, 1.442695
    %v911 = vpow.pop %v910
    %v912 = vadd.f32 %v911, 1.0
    %v913 = vrcp.pop %v912
    %v914 = vmul.f32 1.0, %v913
    %v915 = vtanh.pop %v908
    %v916 = vmul.f32 %v914, %v877
    %918 = vrot.lane.b32.xlu0 %v915, 116
    %v919 = vpop.permute.xlu0 %918
    %v921 = vmul.f32 %v914, %v919
    %923 = vrot.lane.b32.xlu0 %v921, 4
    %v924 = vpop.permute.xlu0 %923
    %v926 = vadd.f32 %v916, %v924
    %v927 = vtanh.pop %v926
    %929 = vrot.lane.b32.xlu0 %v927, 4
    %v930 = vpop.permute.xlu0 %929
    %v932 = vmul.f32 %v914, %v930
    %934 = vset.pattern.permute.xlu0 8
    %935 = vperm.xlu0 %934, %v932
    %v936 = vpop.permute.xlu0 %935
    %v938 = vmul.f32 %v936, %v202
    %v939 = vadd.f32 %v198, %v938
    %940 = vset.pattern.permute.xlu0 9
    %941 = vperm.xlu0 %940, %v932
    %v942 = vpop.permute.xlu0 %941
    %v944 = vmul.f32 %v942, %v208
    %v945 = vadd.f32 %v939, %v944
    %946 = vset.pattern.permute.xlu0 10
    %947 = vperm.xlu0 %946, %v932
    %v948 = vpop.permute.xlu0 %947
    %v950 = vmul.f32 %v948, %v214
    %v951 = vadd.f32 %v945, %v950
    %952 = vset.pattern.permute.xlu0 11
    %953 = vperm.xlu0 %952, %v932
    %v954 = vpop.permute.xlu0 %953
    %v956 = vmul.f32 %v954, %v220
    %v957 = vadd.f32 %v951, %v956
    %v958 = vxor.u32 %v957, 2147483648
    %v959 = vmul.f32 %v958, 1.442695
    %v960 = vpow.pop %v959
    %v961 = vadd.f32 %v960, 1.0
    %v962 = vrcp.pop %v961
    %v963 = vmul.f32 1.0, %v962
    %v964 = vtanh.pop %v957
    %v965 = vmul.f32 %v963, %v926
    %967 = vrot.lane.b32.xlu0 %v964, 116
    %v968 = vpop.permute.xlu0 %967
    %v970 = vmul.f32 %v963, %v968
    %972 = vrot.lane.b32.xlu0 %v970, 4
    %v973 = vpop.permute.xlu0 %972
    %v975 = vadd.f32 %v965, %v973
    %v976 = vtanh.pop %v975
    %978 = vrot.lane.b32.xlu0 %v976, 4
    %v979 = vpop.permute.xlu0 %978
    %v981 = vmul.f32 %v963, %v979
    %v982 = vld [vmem:[%s4] sm:$0xf]
    %984 = vrot.lane.b32.xlu0 %v981, 120
    %v985 = vpop.permute.xlu0 %984
    %vm986 = vcmask 31744
    %v987 = vsel %vm986, %v985, 0
    %vm989 = vcmask 1043456
    %v991 = vsel %vm989, %v982, 0
    %993 = vmatprep.subr.mxu0 0.0
    %994 = vmatpush1.msra.mxu0 %v991
    %995 = vmatprep.subr.mxu0 0.0
    %996 = vmatpush1.msra.mxu0 0.0
    %997 = vmatprep.subr.mxu0 0.0
    %998 = vmatpush1.msra.mxu0 0.0
    %999 = vmatprep.subr.mxu0 0.0
    %1000 = vmatpush1.msra.mxu0 0.0
    %1001 = vmatprep.subr.mxu0 0.0
    %1002 = vmatpush1.msra.mxu0 0.0
    %1003 = vmatprep.subr.mxu0 0.0
    %1004 = vmatpush1.msra.mxu0 0.0
    %1005 = vmatprep.subr.mxu0 0.0
    %1006 = vmatpush1.msra.mxu0 0.0
    %1007 = vmatprep.subr.mxu0 0.0
    %1008 = vmatpush1.msra.mxu0 0.0
    %1009 = vmatprep.subr.mxu0 0.0
    %1010 = vmatpush1.msra.mxu0 0.0
    %1011 = vmatprep.subr.mxu0 0.0
    %1012 = vmatpush1.msra.mxu0 0.0
    %1013 = vmatprep.subr.mxu0 0.0
    %1014 = vmatpush1.msra.mxu0 0.0
    %1015 = vmatprep.subr.mxu0 0.0
    %1016 = vmatpush1.msra.mxu0 0.0
    %1017 = vmatprep.subr.mxu0 0.0
    %1018 = vmatpush1.msra.mxu0 0.0
    %1019 = vmatprep.subr.mxu0 0.0
    %1020 = vmatpush1.msra.mxu0 0.0
    %1021 = vmatprep.subr.mxu0 0.0
    %1022 = vmatpush1.msra.mxu0 0.0
    %1023 = vmatprep.subr.mxu0 0.0
    %1024 = vmatpush1.msra.mxu0 0.0
    %1025 = vmatprep.subr.mxu0 0.0
    %1026 = vmatpush1.msra.mxu0 0.0
    %1027 = vmatprep.subr.mxu0 0.0
    %1028 = vmatpush1.msra.mxu0 0.0
    %1029 = vmatprep.subr.mxu0 0.0
    %1030 = vmatpush1.msra.mxu0 0.0
    %1031 = vmatprep.subr.mxu0 0.0
    %1032 = vmatpush1.msra.mxu0 0.0
    %1033 = vmatprep.subr.mxu0 0.0
    %1034 = vmatpush1.msra.mxu0 0.0
    %1035 = vmatprep.subr.mxu0 0.0
    %1036 = vmatpush1.msra.mxu0 0.0
    %1037 = vmatprep.subr.mxu0 0.0
    %1038 = vmatpush1.msra.mxu0 0.0
    %1039 = vmatprep.subr.mxu0 0.0
    %1040 = vmatpush1.msra.mxu0 0.0
    %1041 = vmatprep.subr.mxu0 0.0
    %1042 = vmatpush1.msra.mxu0 0.0
    %1043 = vmatprep.subr.mxu0 0.0
    %1044 = vmatpush1.msra.mxu0 0.0
    %1045 = vmatprep.subr.mxu0 0.0
    %1046 = vmatpush1.msra.mxu0 0.0
    %1047 = vmatprep.subr.mxu0 0.0
    %1048 = vmatpush1.msra.mxu0 0.0
    %1049 = vmatprep.subr.mxu0 0.0
    %1050 = vmatpush1.msra.mxu0 0.0
    %1051 = vmatprep.subr.mxu0 0.0
    %1052 = vmatpush1.msra.mxu0 0.0
    %1053 = vmatprep.subr.mxu0 0.0
    %1054 = vmatpush1.msra.mxu0 0.0
    %1055 = vmatprep.subr.mxu0 0.0
    %1056 = vmatpush1.msra.mxu0 0.0
    %1057 = vmatprep.mubr.f32.mxu0 0.0
    %1058 = vmatmul.mubr.f32.gmra.mrb[0].mxu0 %v987
    %v1059 = vpop.f32.mrb[0].mxu0
    %v1060 = vadd.f32 0.0, %v1059
    %v1061 = vpop.f32.mrb[0].mxu0
    %1062 = vdwg.mxu0
    %v1063 = vmax.f32 %v1060, 0.0
    %v1064 = vld [vmem:[#allocation2] sm:$0xff]
    %v1065 = vld [vmem:[#allocation2 + $0x8] sm:$0xff]
    %v1066 = vld [vmem:[#allocation2 + $0x10] sm:$0xff]
    %v1067 = vld [vmem:[#allocation2 + $0x18] sm:$0xff]
    %v1068 = vld [vmem:[#allocation2 + $0x20] sm:$0xff]
    %v1069 = vld [vmem:[#allocation2 + $0x28] sm:$0xff]
    %v1070 = vld [vmem:[#allocation2 + $0x30] sm:$0xff]
    %v1071 = vld [vmem:[#allocation2 + $0x38] sm:$0xff]
    %v1072 = vld [vmem:[#allocation2 + $0x40] sm:$0xff]
    %v1073 = vld [vmem:[#allocation2 + $0x48] sm:$0xff]
    %v1074 = vld [vmem:[#allocation2 + $0x50] sm:$0xff]
    %v1075 = vld [vmem:[#allocation2 + $0x58] sm:$0xff]
    %v1076 = vld [vmem:[#allocation2 + $0x60] sm:$0xff]
    %v1077 = vld [vmem:[#allocation2 + $0x68] sm:$0xff]
    %v1078 = vld [vmem:[#allocation2 + $0x70] sm:$0xff]
    %v1079 = vld [vmem:[#allocation2 + $0x78] sm:$0xff]
    %v1080 = vld [vmem:[#allocation2 + $0x80] sm:$0xff]
    %v1081 = vld [vmem:[#allocation2 + $0x88] sm:$0xff]
    %v1082 = vld [vmem:[#allocation2 + $0x90] sm:$0xff]
    %v1083 = vld [vmem:[#allocation2 + $0x98] sm:$0xff]
    %v1084 = vld [vmem:[#allocation2 + $0xa0] sm:$0xff]
    %v1085 = vld [vmem:[#allocation2 + $0xa8] sm:$0xff]
    %v1086 = vld [vmem:[#allocation2 + $0xb0] sm:$0xff]
    %v1087 = vld [vmem:[#allocation2 + $0xb8] sm:$0xff]
    %v1088 = vld [vmem:[#allocation2 + $0xc0] sm:$0xff]
    %v1089 = vld [vmem:[#allocation2 + $0xc8] sm:$0xff]
    %v1090 = vld [vmem:[#allocation2 + $0xd0] sm:$0xff]
    %v1091 = vld [vmem:[#allocation2 + $0xd8] sm:$0xff]
    %v1092 = vld [vmem:[#allocation2 + $0xe0] sm:$0xff]
    %v1093 = vld [vmem:[#allocation2 + $0xe8] sm:$0xff]
    %v1094 = vld [vmem:[#allocation2 + $0xf0] sm:$0xff]
    %v1095 = vld [vmem:[#allocation2 + $0xf8] sm:$0xff]
    %v1096 = vld [vmem:[#allocation2 + $0x100] sm:$0xff]
    %v1097 = vld [vmem:[#allocation2 + $0x108] sm:$0xff]
    %v1098 = vld [vmem:[#allocation2 + $0x110] sm:$0xff]
    %v1099 = vld [vmem:[#allocation2 + $0x118] sm:$0xff]
    %v1100 = vld [vmem:[#allocation2 + $0x120] sm:$0xff]
    %v1101 = vld [vmem:[#allocation2 + $0x128] sm:$0xff]
    %v1102 = vld [vmem:[#allocation2 + $0x130] sm:$0xff]
    %v1103 = vld [vmem:[#allocation2 + $0x138] sm:$0xff]
    %v1104 = vld [vmem:[#allocation2 + $0x140] sm:$0xff]
    %v1105 = vld [vmem:[#allocation2 + $0x148] sm:$0xff]
    %v1106 = vld [vmem:[#allocation2 + $0x150] sm:$0xff]
    %v1107 = vld [vmem:[#allocation2 + $0x158] sm:$0xff]
    %v1108 = vld [vmem:[#allocation2 + $0x160] sm:$0xff]
    %v1109 = vld [vmem:[#allocation2 + $0x168] sm:$0xff]
    %v1110 = vld [vmem:[#allocation2 + $0x170] sm:$0xff]
    %v1111 = vld [vmem:[#allocation2 + $0x178] sm:$0xff]
    %v1112 = vld [vmem:[#allocation2 + $0x180] sm:$0xff]
    %v1113 = vld [vmem:[#allocation2 + $0x188] sm:$0xff]
    %v1114 = vld [vmem:[#allocation2 + $0x190] sm:$0xff]
    %v1115 = vld [vmem:[#allocation2 + $0x198] sm:$0xff]
    %v1116 = vld [vmem:[#allocation2 + $0x1a0] sm:$0xff]
    %v1117 = vld [vmem:[#allocation2 + $0x1a8] sm:$0xff]
    %v1118 = vld [vmem:[#allocation2 + $0x1b0] sm:$0xff]
    %v1119 = vld [vmem:[#allocation2 + $0x1b8] sm:$0xff]
    %v1120 = vld [vmem:[#allocation2 + $0x1c0] sm:$0xff]
    %v1121 = vld [vmem:[#allocation2 + $0x1c8] sm:$0xff]
    %v1122 = vld [vmem:[#allocation2 + $0x1d0] sm:$0xff]
    %v1123 = vld [vmem:[#allocation2 + $0x1d8] sm:$0xff]
    %v1124 = vld [vmem:[#allocation2 + $0x1e0] sm:$0xff]
    %v1125 = vld [vmem:[#allocation2 + $0x1e8] sm:$0xff]
    %v1126 = vld [vmem:[#allocation2 + $0x1f0] sm:$0xff]
    %v1127 = vld [vmem:[#allocation2 + $0x1f8] sm:$0xff]
    %vm1128 = vcmask 523264
    %v1130 = vsel %vm1128, %v1063, 0
    %1132 = vmatprep.subr.mxu0 %v1065
    %1133 = vmatpush1.msra.mxu0 %v1064
    %1134 = vmatprep.subr.mxu0 %v1073
    %1135 = vmatpush1.msra.mxu0 %v1072
    %1136 = vmatprep.subr.mxu0 %v1081
    %1137 = vmatpush1.msra.mxu0 %v1080
    %1138 = vmatprep.subr.mxu0 %v1089
    %1139 = vmatpush1.msra.mxu0 %v1088
    %1140 = vmatprep.subr.mxu0 %v1097
    %1141 = vmatpush1.msra.mxu0 %v1096
    %1142 = vmatprep.subr.mxu0 %v1105
    %1143 = vmatpush1.msra.mxu0 %v1104
    %1144 = vmatprep.subr.mxu0 %v1113
    %1145 = vmatpush1.msra.mxu0 %v1112
    %1146 = vmatprep.subr.mxu0 %v1121
    %1147 = vmatpush1.msra.mxu0 %v1120
    %1148 = vmatprep.subr.mxu0 0.0
    %1149 = vmatpush1.msra.mxu0 0.0
    %1150 = vmatprep.subr.mxu0 0.0
    %1151 = vmatpush1.msra.mxu0 0.0
    %1152 = vmatprep.subr.mxu0 0.0
    %1153 = vmatpush1.msra.mxu0 0.0
    %1154 = vmatprep.subr.mxu0 0.0
    %1155 = vmatpush1.msra.mxu0 0.0
    %1156 = vmatprep.subr.mxu0 0.0
    %1157 = vmatpush1.msra.mxu0 0.0
    %1158 = vmatprep.subr.mxu0 0.0
    %1159 = vmatpush1.msra.mxu0 0.0
    %1160 = vmatprep.subr.mxu0 0.0
    %1161 = vmatpush1.msra.mxu0 0.0
    %1162 = vmatprep.subr.mxu0 0.0
    %1163 = vmatpush1.msra.mxu0 0.0
    %1164 = vmatprep.subr.mxu0 0.0
    %1165 = vmatpush1.msra.mxu0 0.0
    %1166 = vmatprep.subr.mxu0 0.0
    %1167 = vmatpush1.msra.mxu0 0.0
    %1168 = vmatprep.subr.mxu0 0.0
    %1169 = vmatpush1.msra.mxu0 0.0
    %1170 = vmatprep.subr.mxu0 0.0
    %1171 = vmatpush1.msra.mxu0 0.0
    %1172 = vmatprep.subr.mxu0 0.0
    %1173 = vmatpush1.msra.mxu0 0.0
    %1174 = vmatprep.subr.mxu0 0.0
    %1175 = vmatpush1.msra.mxu0 0.0
    %1176 = vmatprep.subr.mxu0 0.0
    %1177 = vmatpush1.msra.mxu0 0.0
    %1178 = vmatprep.subr.mxu0 0.0
    %1179 = vmatpush1.msra.mxu0 0.0
    %1180 = vmatprep.subr.mxu0 0.0
    %1181 = vmatpush1.msra.mxu0 0.0
    %1182 = vmatprep.subr.mxu0 0.0
    %1183 = vmatpush1.msra.mxu0 0.0
    %1184 = vmatprep.subr.mxu0 0.0
    %1185 = vmatpush1.msra.mxu0 0.0
    %1186 = vmatprep.subr.mxu0 0.0
    %1187 = vmatpush1.msra.mxu0 0.0
    %1188 = vmatprep.subr.mxu0 0.0
    %1189 = vmatpush1.msra.mxu0 0.0
    %1190 = vmatprep.subr.mxu0 0.0
    %1191 = vmatpush1.msra.mxu0 0.0
    %1192 = vmatprep.subr.mxu0 0.0
    %1193 = vmatpush1.msra.mxu0 0.0
    %1194 = vmatprep.subr.mxu0 0.0
    %1195 = vmatpush1.msra.mxu0 0.0
    %1196 = vmatprep.mubr.f32.mxu0 0.0
    %1197 = vmatmul.mubr.f32.gmra.mrb[0].mxu0 %v1130
    %v1198 = vpop.f32.mrb[0].mxu0
    %v1199 = vadd.f32 0.0, %v1198
    %v1200 = vpop.f32.mrb[0].mxu0
    %v1201 = vadd.f32 0.0, %v1200
    %1202 = vdwg.mxu0
    %1203 = vmatprep.subr.mxu0 %v1067
    %1204 = vmatpush1.msra.mxu0 %v1066
    %1205 = vmatprep.subr.mxu0 %v1075
    %1206 = vmatpush1.msra.mxu0 %v1074
    %1207 = vmatprep.subr.mxu0 %v1083
    %1208 = vmatpush1.msra.mxu0 %v1082
    %1209 = vmatprep.subr.mxu0 %v1091
    %1210 = vmatpush1.msra.mxu0 %v1090
    %1211 = vmatprep.subr.mxu0 %v1099
    %1212 = vmatpush1.msra.mxu0 %v1098
    %1213 = vmatprep.subr.mxu0 %v1107
    %1214 = vmatpush1.msra.mxu0 %v1106
    %1215 = vmatprep.subr.mxu0 %v1115
    %1216 = vmatpush1.msra.mxu0 %v1114
    %1217 = vmatprep.subr.mxu0 %v1123
    %1218 = vmatpush1.msra.mxu0 %v1122
    %1219 = vmatprep.subr.mxu0 0.0
    %1220 = vmatpush1.msra.mxu0 0.0
    %1221 = vmatprep.subr.mxu0 0.0
    %1222 = vmatpush1.msra.mxu0 0.0
    %1223 = vmatprep.subr.mxu0 0.0
    %1224 = vmatpush1.msra.mxu0 0.0
    %1225 = vmatprep.subr.mxu0 0.0
    %1226 = vmatpush1.msra.mxu0 0.0
    %1227 = vmatprep.subr.mxu0 0.0
    %1228 = vmatpush1.msra.mxu0 0.0
    %1229 = vmatprep.subr.mxu0 0.0
    %1230 = vmatpush1.msra.mxu0 0.0
    %1231 = vmatprep.subr.mxu0 0.0
    %1232 = vmatpush1.msra.mxu0 0.0
    %1233 = vmatprep.subr.mxu0 0.0
    %1234 = vmatpush1.msra.mxu0 0.0
    %1235 = vmatprep.subr.mxu0 0.0
    %1236 = vmatpush1.msra.mxu0 0.0
    %1237 = vmatprep.subr.mxu0 0.0
    %1238 = vmatpush1.msra.mxu0 0.0
    %1239 = vmatprep.subr.mxu0 0.0
    %1240 = vmatpush1.msra.mxu0 0.0
    %1241 = vmatprep.subr.mxu0 0.0
    %1242 = vmatpush1.msra.mxu0 0.0
    %1243 = vmatprep.subr.mxu0 0.0
    %1244 = vmatpush1.msra.mxu0 0.0
    %1245 = vmatprep.subr.mxu0 0.0
    %1246 = vmatpush1.msra.mxu0 0.0
    %1247 = vmatprep.subr.mxu0 0.0
    %1248 = vmatpush1.msra.mxu0 0.0
    %1249 = vmatprep.subr.mxu0 0.0
    %1250 = vmatpush1.msra.mxu0 0.0
    %1251 = vmatprep.subr.mxu0 0.0
    %1252 = vmatpush1.msra.mxu0 0.0
    %1253 = vmatprep.subr.mxu0 0.0
    %1254 = vmatpush1.msra.mxu0 0.0
    %1255 = vmatprep.subr.mxu0 0.0
    %1256 = vmatpush1.msra.mxu0 0.0
    %1257 = vmatprep.subr.mxu0 0.0
    %1258 = vmatpush1.msra.mxu0 0.0
    %1259 = vmatprep.subr.mxu0 0.0
    %1260 = vmatpush1.msra.mxu0 0.0
    %1261 = vmatprep.subr.mxu0 0.0
    %1262 = vmatpush1.msra.mxu0 0.0
    %1263 = vmatprep.subr.mxu0 0.0
    %1264 = vmatpush1.msra.mxu0 0.0
    %1265 = vmatprep.subr.mxu0 0.0
    %1266 = vmatpush1.msra.mxu0 0.0
    %1267 = vmatprep.mubr.f32.mxu0 0.0
    %1268 = vmatmul.mubr.f32.gmra.mrb[0].mxu0 %v1130
    %v1269 = vpop.f32.mrb[0].mxu0
    %v1270 = vadd.f32 0.0, %v1269
    %v1271 = vpop.f32.mrb[0].mxu0
    %v1272 = vadd.f32 0.0, %v1271
    %1273 = vdwg.mxu0
    %1274 = vmatprep.subr.mxu0 %v1069
    %1275 = vmatpush1.msra.mxu0 %v1068
    %1276 = vmatprep.subr.mxu0 %v1077
    %1277 = vmatpush1.msra.mxu0 %v1076
    %1278 = vmatprep.subr.mxu0 %v1085
    %1279 = vmatpush1.msra.mxu0 %v1084
    %1280 = vmatprep.subr.mxu0 %v1093
    %1281 = vmatpush1.msra.mxu0 %v1092
    %1282 = vmatprep.subr.mxu0 %v1101
    %1283 = vmatpush1.msra.mxu0 %v1100
    %1284 = vmatprep.subr.mxu0 %v1109
    %1285 = vmatpush1.msra.mxu0 %v1108
    %1286 = vmatprep.subr.mxu0 %v1117
    %1287 = vmatpush1.msra.mxu0 %v1116
    %1288 = vmatprep.subr.mxu0 %v1125
    %1289 = vmatpush1.msra.mxu0 %v1124
    %1290 = vmatprep.subr.mxu0 0.0
    %1291 = vmatpush1.msra.mxu0 0.0
    %1292 = vmatprep.subr.mxu0 0.0
    %1293 = vmatpush1.msra.mxu0 0.0
    %1294 = vmatprep.subr.mxu0 0.0
    %1295 = vmatpush1.msra.mxu0 0.0
    %1296 = vmatprep.subr.mxu0 0.0
    %1297 = vmatpush1.msra.mxu0 0.0
    %1298 = vmatprep.subr.mxu0 0.0
    %1299 = vmatpush1.msra.mxu0 0.0
    %1300 = vmatprep.subr.mxu0 0.0
    %1301 = vmatpush1.msra.mxu0 0.0
    %1302 = vmatprep.subr.mxu0 0.0
    %1303 = vmatpush1.msra.mxu0 0.0
    %1304 = vmatprep.subr.mxu0 0.0
    %1305 = vmatpush1.msra.mxu0 0.0
    %1306 = vmatprep.subr.mxu0 0.0
    %1307 = vmatpush1.msra.mxu0 0.0
    %1308 = vmatprep.subr.mxu0 0.0
    %1309 = vmatpush1.msra.mxu0 0.0
    %1310 = vmatprep.subr.mxu0 0.0
    %1311 = vmatpush1.msra.mxu0 0.0
    %1312 = vmatprep.subr.mxu0 0.0
    %1313 = vmatpush1.msra.mxu0 0.0
    %1314 = vmatprep.subr.mxu0 0.0
    %1315 = vmatpush1.msra.mxu0 0.0
    %1316 = vmatprep.subr.mxu0 0.0
    %1317 = vmatpush1.msra.mxu0 0.0
    %1318 = vmatprep.subr.mxu0 0.0
    %1319 = vmatpush1.msra.mxu0 0.0
    %1320 = vmatprep.subr.mxu0 0.0
    %1321 = vmatpush1.msra.mxu0 0.0
    %1322 = vmatprep.subr.mxu0 0.0
    %1323 = vmatpush1.msra.mxu0 0.0
    %1324 = vmatprep.subr.mxu0 0.0
    %1325 = vmatpush1.msra.mxu0 0.0
    %1326 = vmatprep.subr.mxu0 0.0
    %1327 = vmatpush1.msra.mxu0 0.0
    %1328 = vmatprep.subr.mxu0 0.0
    %1329 = vmatpush1.msra.mxu0 0.0
    %1330 = vmatprep.subr.mxu0 0.0
    %1331 = vmatpush1.msra.mxu0 0.0
    %1332 = vmatprep.subr.mxu0 0.0
    %1333 = vmatpush1.msra.mxu0 0.0
    %1334 = vmatprep.subr.mxu0 0.0
    %1335 = vmatpush1.msra.mxu0 0.0
    %1336 = vmatprep.subr.mxu0 0.0
    %1337 = vmatpush1.msra.mxu0 0.0
    %1338 = vmatprep.mubr.f32.mxu0 0.0
    %1339 = vmatmul.mubr.f32.gmra.mrb[0].mxu0 %v1130
    %v1340 = vpop.f32.mrb[0].mxu0
    %v1341 = vadd.f32 0.0, %v1340
    %v1342 = vpop.f32.mrb[0].mxu0
    %v1343 = vadd.f32 0.0, %v1342
    %1344 = vdwg.mxu0
    %1345 = vmatprep.subr.mxu0 %v1071
    %1346 = vmatpush1.msra.mxu0 %v1070
    %1347 = vmatprep.subr.mxu0 %v1079
    %1348 = vmatpush1.msra.mxu0 %v1078
    %1349 = vmatprep.subr.mxu0 %v1087
    %1350 = vmatpush1.msra.mxu0 %v1086
    %1351 = vmatprep.subr.mxu0 %v1095
    %1352 = vmatpush1.msra.mxu0 %v1094
    %1353 = vmatprep.subr.mxu0 %v1103
    %1354 = vmatpush1.msra.mxu0 %v1102
    %1355 = vmatprep.subr.mxu0 %v1111
    %1356 = vmatpush1.msra.mxu0 %v1110
    %1357 = vmatprep.subr.mxu0 %v1119
    %1358 = vmatpush1.msra.mxu0 %v1118
    %1359 = vmatprep.subr.mxu0 %v1127
    %1360 = vmatpush1.msra.mxu0 %v1126
    %1361 = vmatprep.subr.mxu0 0.0
    %1362 = vmatpush1.msra.mxu0 0.0
    %1363 = vmatprep.subr.mxu0 0.0
    %1364 = vmatpush1.msra.mxu0 0.0
    %1365 = vmatprep.subr.mxu0 0.0
    %1366 = vmatpush1.msra.mxu0 0.0
    %1367 = vmatprep.subr.mxu0 0.0
    %1368 = vmatpush1.msra.mxu0 0.0
    %1369 = vmatprep.subr.mxu0 0.0
    %1370 = vmatpush1.msra.mxu0 0.0
    %1371 = vmatprep.subr.mxu0 0.0
    %1372 = vmatpush1.msra.mxu0 0.0
    %1373 = vmatprep.subr.mxu0 0.0
    %1374 = vmatpush1.msra.mxu0 0.0
    %1375 = vmatprep.subr.mxu0 0.0
    %1376 = vmatpush1.msra.mxu0 0.0
    %1377 = vmatprep.subr.mxu0 0.0
    %1378 = vmatpush1.msra.mxu0 0.0
    %1379 = vmatprep.subr.mxu0 0.0
    %1380 = vmatpush1.msra.mxu0 0.0
    %1381 = vmatprep.subr.mxu0 0.0
    %1382 = vmatpush1.msra.mxu0 0.0
    %1383 = vmatprep.subr.mxu0 0.0
    %1384 = vmatpush1.msra.mxu0 0.0
    %1385 = vmatprep.subr.mxu0 0.0
    %1386 = vmatpush1.msra.mxu0 0.0
    %1387 = vmatprep.subr.mxu0 0.0
    %1388 = vmatpush1.msra.mxu0 0.0
    %1389 = vmatprep.subr.mxu0 0.0
    %1390 = vmatpush1.msra.mxu0 0.0
    %1391 = vmatprep.subr.mxu0 0.0
    %1392 = vmatpush1.msra.mxu0 0.0
    %1393 = vmatprep.subr.mxu0 0.0
    %1394 = vmatpush1.msra.mxu0 0.0
    %1395 = vmatprep.subr.mxu0 0.0
    %1396 = vmatpush1.msra.mxu0 0.0
    %1397 = vmatprep.subr.mxu0 0.0
    %1398 = vmatpush1.msra.mxu0 0.0
    %1399 = vmatprep.subr.mxu0 0.0
    %1400 = vmatpush1.msra.mxu0 0.0
    %1401 = vmatprep.subr.mxu0 0.0
    %1402 = vmatpush1.msra.mxu0 0.0
    %1403 = vmatprep.subr.mxu0 0.0
    %1404 = vmatpush1.msra.mxu0 0.0
    %1405 = vmatprep.subr.mxu0 0.0
    %1406 = vmatpush1.msra.mxu0 0.0
    %1407 = vmatprep.subr.mxu0 0.0
    %1408 = vmatpush1.msra.mxu0 0.0
    %1409 = vmatprep.mubr.f32.mxu0 0.0
    %1410 = vmatmul.mubr.f32.gmra.mrb[0].mxu0 %v1130
    %v1411 = vpop.f32.mrb[0].mxu0
    %v1412 = vadd.f32 0.0, %v1411
    %v1413 = vpop.f32.mrb[0].mxu0
    %v1414 = vadd.f32 0.0, %v1413
    %1415 = vdwg.mxu0
    %1416 = vst [vmem:[#allocation5] sm:$0xff] %v1199
    %1417 = vst [vmem:[#allocation5 + $0x8] sm:$0xff] %v1201
    %1418 = vst [vmem:[#allocation5 + $0x10] sm:$0xff] %v1270
    %1419 = vst [vmem:[#allocation5 + $0x18] sm:$0xff] %v1272
    %1420 = vst [vmem:[#allocation5 + $0x20] sm:$0xff] %v1341
    %1421 = vst [vmem:[#allocation5 + $0x28] sm:$0xff] %v1343
    %1422 = vst [vmem:[#allocation5 + $0x30] sm:$0xff] %v1412
    %1423 = vst [vmem:[#allocation5 + $0x38] sm:$0xff] %v1414
    // Predicated region
    $region30: #{net_forward.1} parent=1 // pred_check
      _
    $region31: #{net_forward.1} parent=1 // pred_check_branch
      %1425 = sbr.rel (0) target = $region33
    $region32: #{net_forward.1} parent=1 // pred_region
      %s1427 = ssub.s32 1024, 1024
      %1428 = vsyncadd [#allocation4], %s1427
      %s1430 = sshll.u32 [#allocation5], 4
      %s1431 = int_to_ptr.vmem [resolvable:$true] %s1430
      %1433 = dma.vmem_to_hbm [thread:$0]  %s1431, 1024, %s6, [#allocation4]
    $region33: #{net_forward.1} parent=1 // pred_fallthru
      _
    // Predicated region
    $region34: #{net_forward.1} parent=1 // pred_check
      _
    $region35: #{net_forward.1} parent=1 // pred_check_branch
      %1435 = sbr.rel (0) target = $region37
    $region36: #{net_forward.1} parent=1 // pred_region
      %1436 = dma.done [#allocation4], 1024
    $region37: #{net_forward.1} parent=1 // pred_fallthru
      _
    %1437 = vsyncpa [#allocation3], 1
    %1438 = vsyncpa [#allocation4], 1

</llo_original>
